<compile_context>
chip_gen: v7x
topology: tpu7x:2x2x1
jax: 0.10.0
libtpu: 0.0.40
codegen_flags: <defaults>
</compile_context>

<pallas_src>
import functools

import jax
import jax.numpy as jnp
from jax.experimental import pallas as pl
from jax.experimental.pallas import tpu as pltpu

_K = 7          # conv kernel size
_P = _K // 2    # 'same' padding = 3


def _shift_flat(v, s):
    """out[:, i] = v[:, i + s] if 0 <= i + s < N else 0 (static s, zero fill)."""
    n = v.shape[-1]
    if s == 0:
        return v
    if abs(s) >= n:
        return jnp.zeros_like(v)
    if s > 0:
        return jnp.concatenate(
            [v[:, s:], jnp.zeros((v.shape[0], s), v.dtype)], axis=1)
    return jnp.concatenate(
        [jnp.zeros((v.shape[0], -s), v.dtype), v[:, :n + s]], axis=1)


def _sam_kernel(x_ref, w_ref, b_ref, o_ref, *, width):
    # x_ref : (C, H*W)   VMEM   one batch element, lane-dense
    # w_ref : (2*7*7,)   SMEM   flattened Conv2d(2, 1, 7) weight
    # b_ref : (1,)       SMEM   conv bias
    # o_ref : (C, H*W)   VMEM
    c, hw = x_ref.shape

    # --- channel pooling (reduce over the sublane axis; f32 accumulation) ---
    xv = x_ref[...]
    avg = jnp.sum(xv, axis=0, keepdims=True, dtype=jnp.float32) * (1.0 / c)
    mx = jnp.max(xv, axis=0, keepdims=True).astype(jnp.float32)      # (1, HW)

    # --- column index col[i] = i % width, built without int div/mod ---------
    col = jax.lax.broadcasted_iota(jnp.int32, (1, width), 1)
    while col.shape[1] < hw:
        col = jnp.concatenate([col, col], axis=1)
    col = col[:, :hw]

    # --- 7x7 conv (2 -> 1 channel): flat zero-fill shifts + column masks ----
    acc_a = jnp.zeros((1, hw), jnp.float32)
    acc_m = jnp.zeros((1, hw), jnp.float32)
    for dx in range(_K):
        k = dx - _P                                    # column offset in [-3, 3]
        qa = _shift_flat(avg, k)
        qm = _shift_flat(mx, k)
        if k != 0:                                     # zero columns that wrapped
            maskf = jnp.logical_and(col + k >= 0, col + k < width)
            maskf = maskf.astype(jnp.float32)
            qa = qa * maskf
            qm = qm * maskf
        for dy in range(_K):
            s = (dy - _P) * width                      # row offset (zero fill)
            acc_a = acc_a + w_ref[dy * _K + dx] * _shift_flat(qa, s)
            acc_m = acc_m + w_ref[_K * _K + dy * _K + dx] * _shift_flat(qm, s)

    attn = jax.nn.sigmoid(acc_a + acc_m + b_ref[0])    # (1, HW), f32

    # --- gate: single lane-dense slab multiply + store ----------------------
    o_ref[...] = (x_ref[...] * attn.astype(x_ref.dtype)).astype(o_ref.dtype)


def spatial_attention(x, w, b):
    """x: (B, C, H, W); w: (2, 7, 7) conv weight (out-channel squeezed);
    b: scalar conv bias.  Returns sigmoid(conv7x7([mean_c, max_c])) * x."""
    B, C, H, W = x.shape
    HW = H * W
    x_flat = x.reshape(B, C, HW)                          # free, lane-dense view
    w_flat = jnp.asarray(w, jnp.float32).reshape(-1)      # (98,)
    b_arr = jnp.asarray(b, jnp.float32).reshape(1)        # (1,)

    # 2x double-buffered input + 2x output blocks + headroom for conv temps.
    block_bytes = C * HW * x.dtype.itemsize
    vmem_limit = int(min(96 * 1024 * 1024,
                         max(16 * 1024 * 1024,
                             4 * block_bytes + 4 * 1024 * 1024)))

    flops = B * HW * (3 * C + 8 * _K * _K + 8)
    transcendentals = B * HW                               # sigmoid
    bytes_accessed = 2 * B * C * HW * x.dtype.itemsize + 4 * (w_flat.size + 1)

    # NOTE: input_output_aliases={0: 0} would halve HBM footprint (in-place
    # gating) but is omitted so the caller's x stays valid for reuse.
    out = pl.pallas_call(
        functools.partial(_sam_kernel, width=W),
        out_shape=jax.ShapeDtypeStruct((B, C, HW), x.dtype),
        grid=(B,),
        in_specs=[
            # One lane-dense (C, H*W) slab per step; batch dim squeezed out.
            pl.BlockSpec((None, C, HW), lambda i: (i, 0, 0)),
            # Tiny conv params stay resident in SMEM (scalar reads).
            pl.BlockSpec(memory_space=pltpu.MemorySpace.SMEM),
            pl.BlockSpec(memory_space=pltpu.MemorySpace.SMEM),
        ],
        out_specs=pl.BlockSpec((None, C, HW), lambda i: (i, 0, 0)),
        compiler_params=pltpu.CompilerParams(
            dimension_semantics=("parallel",),
            vmem_limit_bytes=vmem_limit),
        cost_estimate=pl.CostEstimate(
            flops=flops,
            transcendentals=transcendentals,
            bytes_accessed=bytes_accessed),
    )(x_flat, w_flat, b_arr)
    return out.reshape(B, C, H, W)


def _reference(x, w, b):
    """Pure-JAX mirror of the PyTorch forward."""
    avg = jnp.mean(x, axis=1, keepdims=True)               # (B, 1, H, W)
    mx = jnp.max(x, axis=1, keepdims=True)                 # (B, 1, H, W)
    s = jnp.concatenate([avg, mx], axis=1)                 # (B, 2, H, W)
    conv = jax.lax.conv_general_dilated(
        s, w[jnp.newaxis],                                 # (1, 2, 7, 7) OIHW
        window_strides=(1, 1), padding=((_P, _P), (_P, _P)),
        dimension_numbers=("NCHW", "OIHW", "NCHW"))
    attn = jax.nn.sigmoid(conv + b)                        # (B, 1, H, W)
    return attn * x


if __name__ == "__main__":
    key = jax.random.PRNGKey(0)
    kx, kw, kb, kx2 = jax.random.split(key, 4)

    # Conv2d(2, 1, kernel_size=7, padding=3) parameters (out-channel squeezed).
    w = jax.random.normal(kw, (2, _K, _K), dtype=jnp.float32) * 0.1
    b = jax.random.normal(kb, (), dtype=jnp.float32) * 0.1

    # --- f32 case -----------------------------------------------------------
    B, C, H, W = 2, 4, 16, 16
    x = jax.random.normal(kx, (B, C, H, W), dtype=jnp.float32)
    out = jax.block_until_ready(spatial_attention(x, w, b))
    ref = _reference(x, w, b)
    assert out.shape == (B, C, H, W)
    assert jnp.allclose(out, ref, atol=1e-5, rtol=1e-5), float(
        jnp.max(jnp.abs(out - ref)))

    # --- bf16, non-square spatial (exercises the reduced-precision gate) ----
    B2, C2, H2, W2 = 2, 8, 24, 20
    xb = jax.random.normal(kx2, (B2, C2, H2, W2), dtype=jnp.float32)
    xb_bf16 = xb.astype(jnp.bfloat16)
    out_b = jax.block_until_ready(spatial_attention(xb_bf16, w, b))
    ref_b = _reference(xb_bf16.astype(jnp.float32), w, b)
    assert out_b.shape == (B2, C2, H2, W2)
    assert out_b.dtype == jnp.bfloat16
    assert jnp.allclose(out_b.astype(jnp.float32), ref_b, atol=5e-2, rtol=5e-2), \
        float(jnp.max(jnp.abs(out_b.astype(jnp.float32) - ref_b)))

    print("KERNEL_OK")
</pallas_src>

<mosaic_0001>
module attributes {stable_mosaic.version = 11 : i64} {
  func.func @_sam_kernel(%arg0: i32, %arg1: memref<1x4x256xf32, #tpu.memory_space<vmem>>, %arg2: memref<98xf32, #tpu.memory_space<smem>>, %arg3: memref<1xf32, #tpu.memory_space<smem>>, %arg4: memref<1x4x256xf32, #tpu.memory_space<vmem>>) attributes {dimension_semantics = [#tpu.dimension_semantics<parallel>], iteration_bounds = array<i64: 2>, scalar_prefetch = 0 : i64, scratch_operands = 0 : i64, tpu.core_type = #tpu.core_type<tc>, window_params = [{transform_indices = @transform_0, window_bounds = array<i64: 1, 4, 256>}, {transform_indices = @transform_1, window_bounds = array<i64: 98>}, {transform_indices = @transform_2, window_bounds = array<i64: 1>}, {transform_indices = @transform_3, window_bounds = array<i64: 1, 4, 256>}]} {
    %c0 = arith.constant 0 : index
    %c0_0 = arith.constant 0 : index
    %c0_1 = arith.constant 0 : index
    %0 = vector.load %arg1[%c0, %c0_0, %c0_1] : memref<1x4x256xf32, #tpu.memory_space<vmem>>, vector<1x4x256xf32>
    %1 = vector.shape_cast %0 : vector<1x4x256xf32> to vector<4x256xf32>
    %cst = arith.constant dense<0.000000e+00> : vector<256xf32>
    %2 = vector.multi_reduction <add>, %1, %cst [0] : vector<4x256xf32> to vector<256xf32>
    %3 = vector.shape_cast %2 : vector<256xf32> to vector<1x256xf32>
    %cst_2 = arith.constant 2.500000e-01 : f32
    %4 = vector.broadcast %cst_2 : f32 to vector<1x256xf32>
    %5 = arith.mulf %3, %4 : vector<1x256xf32>
    %cst_3 = arith.constant dense<0xFF800000> : vector<256xf32>
    %6 = vector.multi_reduction <maximumf>, %1, %cst_3 [0] : vector<4x256xf32> to vector<256xf32>
    %7 = vector.shape_cast %6 : vector<256xf32> to vector<1x256xf32>
    %8 = tpu.iota {dimensions = array<i32: 1>} : vector<1x16xi32>
    %9 = tpu.concatenate %8, %8 in 1 : vector<1x16xi32>, vector<1x16xi32> -> vector<1x32xi32>
    %10 = tpu.concatenate %9, %9 in 1 : vector<1x32xi32>, vector<1x32xi32> -> vector<1x64xi32>
    %11 = tpu.concatenate %10, %10 in 1 : vector<1x64xi32>, vector<1x64xi32> -> vector<1x128xi32>
    %12 = tpu.concatenate %11, %11 in 1 : vector<1x128xi32>, vector<1x128xi32> -> vector<1x256xi32>
    %cst_4 = arith.constant 0.000000e+00 : f32
    %13 = vector.broadcast %cst_4 : f32 to vector<1x256xf32>
    %cst_5 = arith.constant 0.000000e+00 : f32
    %14 = vector.broadcast %cst_5 : f32 to vector<1x256xf32>
    %cst_6 = arith.constant 0.000000e+00 : f32
    %15 = vector.broadcast %cst_6 : f32 to vector<1x3xf32>
    %16 = vector.extract_strided_slice %5 {offsets = [0, 0], sizes = [1, 253], strides = [1, 1]} : vector<1x256xf32> to vector<1x253xf32>
    %17 = tpu.concatenate %15, %16 in 1 : vector<1x3xf32>, vector<1x253xf32> -> vector<1x256xf32>
    %cst_7 = arith.constant 0.000000e+00 : f32
    %18 = vector.broadcast %cst_7 : f32 to vector<1x3xf32>
    %19 = vector.extract_strided_slice %7 {offsets = [0, 0], sizes = [1, 253], strides = [1, 1]} : vector<1x256xf32> to vector<1x253xf32>
    %20 = tpu.concatenate %18, %19 in 1 : vector<1x3xf32>, vector<1x253xf32> -> vector<1x256xf32>
    %c-3_i32 = arith.constant -3 : i32
    %21 = vector.broadcast %c-3_i32 : i32 to vector<1x256xi32>
    %22 = arith.addi %12, %21 : vector<1x256xi32>
    %c0_i32 = arith.constant 0 : i32
    %23 = vector.broadcast %c0_i32 : i32 to vector<1x256xi32>
    %24 = arith.cmpi sge, %22, %23 : vector<1x256xi32>
    %c-3_i32_8 = arith.constant -3 : i32
    %25 = vector.broadcast %c-3_i32_8 : i32 to vector<1x256xi32>
    %26 = arith.addi %12, %25 : vector<1x256xi32>
    %c16_i32 = arith.constant 16 : i32
    %27 = vector.broadcast %c16_i32 : i32 to vector<1x256xi32>
    %28 = arith.cmpi slt, %26, %27 : vector<1x256xi32>
    %29 = arith.andi %24, %28 : vector<1x256xi1>
    %30 = arith.extui %29 : vector<1x256xi1> to vector<1x256xi32>
    %31 = arith.sitofp %30 : vector<1x256xi32> to vector<1x256xf32>
    %32 = arith.mulf %17, %31 : vector<1x256xf32>
    %33 = arith.mulf %20, %31 : vector<1x256xf32>
    %c0_9 = arith.constant 0 : index
    %34 = memref.load %arg2[%c0_9] : memref<98xf32, #tpu.memory_space<smem>>
    %cst_10 = arith.constant 0.000000e+00 : f32
    %35 = vector.broadcast %cst_10 : f32 to vector<1x48xf32>
    %36 = vector.extract_strided_slice %32 {offsets = [0, 0], sizes = [1, 208], strides = [1, 1]} : vector<1x256xf32> to vector<1x208xf32>
    %37 = tpu.concatenate %35, %36 in 1 : vector<1x48xf32>, vector<1x208xf32> -> vector<1x256xf32>
    %38 = vector.broadcast %34 : f32 to vector<1x256xf32>
    %39 = arith.mulf %38, %37 : vector<1x256xf32>
    %40 = arith.addf %13, %39 : vector<1x256xf32>
    %c49 = arith.constant 49 : index
    %41 = memref.load %arg2[%c49] : memref<98xf32, #tpu.memory_space<smem>>
    %cst_11 = arith.constant 0.000000e+00 : f32
    %42 = vector.broadcast %cst_11 : f32 to vector<1x48xf32>
    %43 = vector.extract_strided_slice %33 {offsets = [0, 0], sizes = [1, 208], strides = [1, 1]} : vector<1x256xf32> to vector<1x208xf32>
    %44 = tpu.concatenate %42, %43 in 1 : vector<1x48xf32>, vector<1x208xf32> -> vector<1x256xf32>
    %45 = vector.broadcast %41 : f32 to vector<1x256xf32>
    %46 = arith.mulf %45, %44 : vector<1x256xf32>
    %47 = arith.addf %14, %46 : vector<1x256xf32>
    %c7 = arith.constant 7 : index
    %48 = memref.load %arg2[%c7] : memref<98xf32, #tpu.memory_space<smem>>
    %cst_12 = arith.constant 0.000000e+00 : f32
    %49 = vector.broadcast %cst_12 : f32 to vector<1x32xf32>
    %50 = vector.extract_strided_slice %32 {offsets = [0, 0], sizes = [1, 224], strides = [1, 1]} : vector<1x256xf32> to vector<1x224xf32>
    %51 = tpu.concatenate %49, %50 in 1 : vector<1x32xf32>, vector<1x224xf32> -> vector<1x256xf32>
    %52 = vector.broadcast %48 : f32 to vector<1x256xf32>
    %53 = arith.mulf %52, %51 : vector<1x256xf32>
    %54 = arith.addf %40, %53 : vector<1x256xf32>
    %c56 = arith.constant 56 : index
    %55 = memref.load %arg2[%c56] : memref<98xf32, #tpu.memory_space<smem>>
    %cst_13 = arith.constant 0.000000e+00 : f32
    %56 = vector.broadcast %cst_13 : f32 to vector<1x32xf32>
    %57 = vector.extract_strided_slice %33 {offsets = [0, 0], sizes = [1, 224], strides = [1, 1]} : vector<1x256xf32> to vector<1x224xf32>
    %58 = tpu.concatenate %56, %57 in 1 : vector<1x32xf32>, vector<1x224xf32> -> vector<1x256xf32>
    %59 = vector.broadcast %55 : f32 to vector<1x256xf32>
    %60 = arith.mulf %59, %58 : vector<1x256xf32>
    %61 = arith.addf %47, %60 : vector<1x256xf32>
    %c14 = arith.constant 14 : index
    %62 = memref.load %arg2[%c14] : memref<98xf32, #tpu.memory_space<smem>>
    %cst_14 = arith.constant 0.000000e+00 : f32
    %63 = vector.broadcast %cst_14 : f32 to vector<1x16xf32>
    %64 = vector.extract_strided_slice %32 {offsets = [0, 0], sizes = [1, 240], strides = [1, 1]} : vector<1x256xf32> to vector<1x240xf32>
    %65 = tpu.concatenate %63, %64 in 1 : vector<1x16xf32>, vector<1x240xf32> -> vector<1x256xf32>
    %66 = vector.broadcast %62 : f32 to vector<1x256xf32>
    %67 = arith.mulf %66, %65 : vector<1x256xf32>
    %68 = arith.addf %54, %67 : vector<1x256xf32>
    %c63 = arith.constant 63 : index
    %69 = memref.load %arg2[%c63] : memref<98xf32, #tpu.memory_space<smem>>
    %cst_15 = arith.constant 0.000000e+00 : f32
    %70 = vector.broadcast %cst_15 : f32 to vector<1x16xf32>
    %71 = vector.extract_strided_slice %33 {offsets = [0, 0], sizes = [1, 240], strides = [1, 1]} : vector<1x256xf32> to vector<1x240xf32>
    %72 = tpu.concatenate %70, %71 in 1 : vector<1x16xf32>, vector<1x240xf32> -> vector<1x256xf32>
    %73 = vector.broadcast %69 : f32 to vector<1x256xf32>
    %74 = arith.mulf %73, %72 : vector<1x256xf32>
    %75 = arith.addf %61, %74 : vector<1x256xf32>
    %c21 = arith.constant 21 : index
    %76 = memref.load %arg2[%c21] : memref<98xf32, #tpu.memory_space<smem>>
    %77 = vector.broadcast %76 : f32 to vector<1x256xf32>
    %78 = arith.mulf %77, %32 : vector<1x256xf32>
    %79 = arith.addf %68, %78 : vector<1x256xf32>
    %c70 = arith.constant 70 : index
    %80 = memref.load %arg2[%c70] : memref<98xf32, #tpu.memory_space<smem>>
    %81 = vector.broadcast %80 : f32 to vector<1x256xf32>
    %82 = arith.mulf %81, %33 : vector<1x256xf32>
    %83 = arith.addf %75, %82 : vector<1x256xf32>
    %c28 = arith.constant 28 : index
    %84 = memref.load %arg2[%c28] : memref<98xf32, #tpu.memory_space<smem>>
    %85 = vector.extract_strided_slice %32 {offsets = [0, 16], sizes = [1, 240], strides = [1, 1]} : vector<1x256xf32> to vector<1x240xf32>
    %cst_16 = arith.constant 0.000000e+00 : f32
    %86 = vector.broadcast %cst_16 : f32 to vector<1x16xf32>
    %87 = tpu.concatenate %85, %86 in 1 : vector<1x240xf32>, vector<1x16xf32> -> vector<1x256xf32>
    %88 = vector.broadcast %84 : f32 to vector<1x256xf32>
    %89 = arith.mulf %88, %87 : vector<1x256xf32>
    %90 = arith.addf %79, %89 : vector<1x256xf32>
    %c77 = arith.constant 77 : index
    %91 = memref.load %arg2[%c77] : memref<98xf32, #tpu.memory_space<smem>>
    %92 = vector.extract_strided_slice %33 {offsets = [0, 16], sizes = [1, 240], strides = [1, 1]} : vector<1x256xf32> to vector<1x240xf32>
    %cst_17 = arith.constant 0.000000e+00 : f32
    %93 = vector.broadcast %cst_17 : f32 to vector<1x16xf32>
    %94 = tpu.concatenate %92, %93 in 1 : vector<1x240xf32>, vector<1x16xf32> -> vector<1x256xf32>
    %95 = vector.broadcast %91 : f32 to vector<1x256xf32>
    %96 = arith.mulf %95, %94 : vector<1x256xf32>
    %97 = arith.addf %83, %96 : vector<1x256xf32>
    %c35 = arith.constant 35 : index
    %98 = memref.load %arg2[%c35] : memref<98xf32, #tpu.memory_space<smem>>
    %99 = vector.extract_strided_slice %32 {offsets = [0, 32], sizes = [1, 224], strides = [1, 1]} : vector<1x256xf32> to vector<1x224xf32>
    %cst_18 = arith.constant 0.000000e+00 : f32
    %100 = vector.broadcast %cst_18 : f32 to vector<1x32xf32>
    %101 = tpu.concatenate %99, %100 in 1 : vector<1x224xf32>, vector<1x32xf32> -> vector<1x256xf32>
    %102 = vector.broadcast %98 : f32 to vector<1x256xf32>
    %103 = arith.mulf %102, %101 : vector<1x256xf32>
    %104 = arith.addf %90, %103 : vector<1x256xf32>
    %c84 = arith.constant 84 : index
    %105 = memref.load %arg2[%c84] : memref<98xf32, #tpu.memory_space<smem>>
    %106 = vector.extract_strided_slice %33 {offsets = [0, 32], sizes = [1, 224], strides = [1, 1]} : vector<1x256xf32> to vector<1x224xf32>
    %cst_19 = arith.constant 0.000000e+00 : f32
    %107 = vector.broadcast %cst_19 : f32 to vector<1x32xf32>
    %108 = tpu.concatenate %106, %107 in 1 : vector<1x224xf32>, vector<1x32xf32> -> vector<1x256xf32>
    %109 = vector.broadcast %105 : f32 to vector<1x256xf32>
    %110 = arith.mulf %109, %108 : vector<1x256xf32>
    %111 = arith.addf %97, %110 : vector<1x256xf32>
    %c42 = arith.constant 42 : index
    %112 = memref.load %arg2[%c42] : memref<98xf32, #tpu.memory_space<smem>>
    %113 = vector.extract_strided_slice %32 {offsets = [0, 48], sizes = [1, 208], strides = [1, 1]} : vector<1x256xf32> to vector<1x208xf32>
    %cst_20 = arith.constant 0.000000e+00 : f32
    %114 = vector.broadcast %cst_20 : f32 to vector<1x48xf32>
    %115 = tpu.concatenate %113, %114 in 1 : vector<1x208xf32>, vector<1x48xf32> -> vector<1x256xf32>
    %116 = vector.broadcast %112 : f32 to vector<1x256xf32>
    %117 = arith.mulf %116, %115 : vector<1x256xf32>
    %118 = arith.addf %104, %117 : vector<1x256xf32>
    %c91 = arith.constant 91 : index
    %119 = memref.load %arg2[%c91] : memref<98xf32, #tpu.memory_space<smem>>
    %120 = vector.extract_strided_slice %33 {offsets = [0, 48], sizes = [1, 208], strides = [1, 1]} : vector<1x256xf32> to vector<1x208xf32>
    %cst_21 = arith.constant 0.000000e+00 : f32
    %121 = vector.broadcast %cst_21 : f32 to vector<1x48xf32>
    %122 = tpu.concatenate %120, %121 in 1 : vector<1x208xf32>, vector<1x48xf32> -> vector<1x256xf32>
    %123 = vector.broadcast %119 : f32 to vector<1x256xf32>
    %124 = arith.mulf %123, %122 : vector<1x256xf32>
    %125 = arith.addf %111, %124 : vector<1x256xf32>
    %cst_22 = arith.constant 0.000000e+00 : f32
    %126 = vector.broadcast %cst_22 : f32 to vector<1x2xf32>
    %127 = vector.extract_strided_slice %5 {offsets = [0, 0], sizes = [1, 254], strides = [1, 1]} : vector<1x256xf32> to vector<1x254xf32>
    %128 = tpu.concatenate %126, %127 in 1 : vector<1x2xf32>, vector<1x254xf32> -> vector<1x256xf32>
    %cst_23 = arith.constant 0.000000e+00 : f32
    %129 = vector.broadcast %cst_23 : f32 to vector<1x2xf32>
    %130 = vector.extract_strided_slice %7 {offsets = [0, 0], sizes = [1, 254], strides = [1, 1]} : vector<1x256xf32> to vector<1x254xf32>
    %131 = tpu.concatenate %129, %130 in 1 : vector<1x2xf32>, vector<1x254xf32> -> vector<1x256xf32>
    %c-2_i32 = arith.constant -2 : i32
    %132 = vector.broadcast %c-2_i32 : i32 to vector<1x256xi32>
    %133 = arith.addi %12, %132 : vector<1x256xi32>
    %c0_i32_24 = arith.constant 0 : i32
    %134 = vector.broadcast %c0_i32_24 : i32 to vector<1x256xi32>
    %135 = arith.cmpi sge, %133, %134 : vector<1x256xi32>
    %c-2_i32_25 = arith.constant -2 : i32
    %136 = vector.broadcast %c-2_i32_25 : i32 to vector<1x256xi32>
    %137 = arith.addi %12, %136 : vector<1x256xi32>
    %c16_i32_26 = arith.constant 16 : i32
    %138 = vector.broadcast %c16_i32_26 : i32 to vector<1x256xi32>
    %139 = arith.cmpi slt, %137, %138 : vector<1x256xi32>
    %140 = arith.andi %135, %139 : vector<1x256xi1>
    %141 = arith.extui %140 : vector<1x256xi1> to vector<1x256xi32>
    %142 = arith.sitofp %141 : vector<1x256xi32> to vector<1x256xf32>
    %143 = arith.mulf %128, %142 : vector<1x256xf32>
    %144 = arith.mulf %131, %142 : vector<1x256xf32>
    %c1 = arith.constant 1 : index
    %145 = memref.load %arg2[%c1] : memref<98xf32, #tpu.memory_space<smem>>
    %cst_27 = arith.constant 0.000000e+00 : f32
    %146 = vector.broadcast %cst_27 : f32 to vector<1x48xf32>
    %147 = vector.extract_strided_slice %143 {offsets = [0, 0], sizes = [1, 208], strides = [1, 1]} : vector<1x256xf32> to vector<1x208xf32>
    %148 = tpu.concatenate %146, %147 in 1 : vector<1x48xf32>, vector<1x208xf32> -> vector<1x256xf32>
    %149 = vector.broadcast %145 : f32 to vector<1x256xf32>
    %150 = arith.mulf %149, %148 : vector<1x256xf32>
    %151 = arith.addf %118, %150 : vector<1x256xf32>
    %c50 = arith.constant 50 : index
    %152 = memref.load %arg2[%c50] : memref<98xf32, #tpu.memory_space<smem>>
    %cst_28 = arith.constant 0.000000e+00 : f32
    %153 = vector.broadcast %cst_28 : f32 to vector<1x48xf32>
    %154 = vector.extract_strided_slice %144 {offsets = [0, 0], sizes = [1, 208], strides = [1, 1]} : vector<1x256xf32> to vector<1x208xf32>
    %155 = tpu.concatenate %153, %154 in 1 : vector<1x48xf32>, vector<1x208xf32> -> vector<1x256xf32>
    %156 = vector.broadcast %152 : f32 to vector<1x256xf32>
    %157 = arith.mulf %156, %155 : vector<1x256xf32>
    %158 = arith.addf %125, %157 : vector<1x256xf32>
    %c8 = arith.constant 8 : index
    %159 = memref.load %arg2[%c8] : memref<98xf32, #tpu.memory_space<smem>>
    %cst_29 = arith.constant 0.000000e+00 : f32
    %160 = vector.broadcast %cst_29 : f32 to vector<1x32xf32>
    %161 = vector.extract_strided_slice %143 {offsets = [0, 0], sizes = [1, 224], strides = [1, 1]} : vector<1x256xf32> to vector<1x224xf32>
    %162 = tpu.concatenate %160, %161 in 1 : vector<1x32xf32>, vector<1x224xf32> -> vector<1x256xf32>
    %163 = vector.broadcast %159 : f32 to vector<1x256xf32>
    %164 = arith.mulf %163, %162 : vector<1x256xf32>
    %165 = arith.addf %151, %164 : vector<1x256xf32>
    %c57 = arith.constant 57 : index
    %166 = memref.load %arg2[%c57] : memref<98xf32, #tpu.memory_space<smem>>
    %cst_30 = arith.constant 0.000000e+00 : f32
    %167 = vector.broadcast %cst_30 : f32 to vector<1x32xf32>
    %168 = vector.extract_strided_slice %144 {offsets = [0, 0], sizes = [1, 224], strides = [1, 1]} : vector<1x256xf32> to vector<1x224xf32>
    %169 = tpu.concatenate %167, %168 in 1 : vector<1x32xf32>, vector<1x224xf32> -> vector<1x256xf32>
    %170 = vector.broadcast %166 : f32 to vector<1x256xf32>
    %171 = arith.mulf %170, %169 : vector<1x256xf32>
    %172 = arith.addf %158, %171 : vector<1x256xf32>
    %c15 = arith.constant 15 : index
    %173 = memref.load %arg2[%c15] : memref<98xf32, #tpu.memory_space<smem>>
    %cst_31 = arith.constant 0.000000e+00 : f32
    %174 = vector.broadcast %cst_31 : f32 to vector<1x16xf32>
    %175 = vector.extract_strided_slice %143 {offsets = [0, 0], sizes = [1, 240], strides = [1, 1]} : vector<1x256xf32> to vector<1x240xf32>
    %176 = tpu.concatenate %174, %175 in 1 : vector<1x16xf32>, vector<1x240xf32> -> vector<1x256xf32>
    %177 = vector.broadcast %173 : f32 to vector<1x256xf32>
    %178 = arith.mulf %177, %176 : vector<1x256xf32>
    %179 = arith.addf %165, %178 : vector<1x256xf32>
    %c64 = arith.constant 64 : index
    %180 = memref.load %arg2[%c64] : memref<98xf32, #tpu.memory_space<smem>>
    %cst_32 = arith.constant 0.000000e+00 : f32
    %181 = vector.broadcast %cst_32 : f32 to vector<1x16xf32>
    %182 = vector.extract_strided_slice %144 {offsets = [0, 0], sizes = [1, 240], strides = [1, 1]} : vector<1x256xf32> to vector<1x240xf32>
    %183 = tpu.concatenate %181, %182 in 1 : vector<1x16xf32>, vector<1x240xf32> -> vector<1x256xf32>
    %184 = vector.broadcast %180 : f32 to vector<1x256xf32>
    %185 = arith.mulf %184, %183 : vector<1x256xf32>
    %186 = arith.addf %172, %185 : vector<1x256xf32>
    %c22 = arith.constant 22 : index
    %187 = memref.load %arg2[%c22] : memref<98xf32, #tpu.memory_space<smem>>
    %188 = vector.broadcast %187 : f32 to vector<1x256xf32>
    %189 = arith.mulf %188, %143 : vector<1x256xf32>
    %190 = arith.addf %179, %189 : vector<1x256xf32>
    %c71 = arith.constant 71 : index
    %191 = memref.load %arg2[%c71] : memref<98xf32, #tpu.memory_space<smem>>
    %192 = vector.broadcast %191 : f32 to vector<1x256xf32>
    %193 = arith.mulf %192, %144 : vector<1x256xf32>
    %194 = arith.addf %186, %193 : vector<1x256xf32>
    %c29 = arith.constant 29 : index
    %195 = memref.load %arg2[%c29] : memref<98xf32, #tpu.memory_space<smem>>
    %196 = vector.extract_strided_slice %143 {offsets = [0, 16], sizes = [1, 240], strides = [1, 1]} : vector<1x256xf32> to vector<1x240xf32>
    %cst_33 = arith.constant 0.000000e+00 : f32
    %197 = vector.broadcast %cst_33 : f32 to vector<1x16xf32>
    %198 = tpu.concatenate %196, %197 in 1 : vector<1x240xf32>, vector<1x16xf32> -> vector<1x256xf32>
    %199 = vector.broadcast %195 : f32 to vector<1x256xf32>
    %200 = arith.mulf %199, %198 : vector<1x256xf32>
    %201 = arith.addf %190, %200 : vector<1x256xf32>
    %c78 = arith.constant 78 : index
    %202 = memref.load %arg2[%c78] : memref<98xf32, #tpu.memory_space<smem>>
    %203 = vector.extract_strided_slice %144 {offsets = [0, 16], sizes = [1, 240], strides = [1, 1]} : vector<1x256xf32> to vector<1x240xf32>
    %cst_34 = arith.constant 0.000000e+00 : f32
    %204 = vector.broadcast %cst_34 : f32 to vector<1x16xf32>
    %205 = tpu.concatenate %203, %204 in 1 : vector<1x240xf32>, vector<1x16xf32> -> vector<1x256xf32>
    %206 = vector.broadcast %202 : f32 to vector<1x256xf32>
    %207 = arith.mulf %206, %205 : vector<1x256xf32>
    %208 = arith.addf %194, %207 : vector<1x256xf32>
    %c36 = arith.constant 36 : index
    %209 = memref.load %arg2[%c36] : memref<98xf32, #tpu.memory_space<smem>>
    %210 = vector.extract_strided_slice %143 {offsets = [0, 32], sizes = [1, 224], strides = [1, 1]} : vector<1x256xf32> to vector<1x224xf32>
    %cst_35 = arith.constant 0.000000e+00 : f32
    %211 = vector.broadcast %cst_35 : f32 to vector<1x32xf32>
    %212 = tpu.concatenate %210, %211 in 1 : vector<1x224xf32>, vector<1x32xf32> -> vector<1x256xf32>
    %213 = vector.broadcast %209 : f32 to vector<1x256xf32>
    %214 = arith.mulf %213, %212 : vector<1x256xf32>
    %215 = arith.addf %201, %214 : vector<1x256xf32>
    %c85 = arith.constant 85 : index
    %216 = memref.load %arg2[%c85] : memref<98xf32, #tpu.memory_space<smem>>
    %217 = vector.extract_strided_slice %144 {offsets = [0, 32], sizes = [1, 224], strides = [1, 1]} : vector<1x256xf32> to vector<1x224xf32>
    %cst_36 = arith.constant 0.000000e+00 : f32
    %218 = vector.broadcast %cst_36 : f32 to vector<1x32xf32>
    %219 = tpu.concatenate %217, %218 in 1 : vector<1x224xf32>, vector<1x32xf32> -> vector<1x256xf32>
    %220 = vector.broadcast %216 : f32 to vector<1x256xf32>
    %221 = arith.mulf %220, %219 : vector<1x256xf32>
    %222 = arith.addf %208, %221 : vector<1x256xf32>
    %c43 = arith.constant 43 : index
    %223 = memref.load %arg2[%c43] : memref<98xf32, #tpu.memory_space<smem>>
    %224 = vector.extract_strided_slice %143 {offsets = [0, 48], sizes = [1, 208], strides = [1, 1]} : vector<1x256xf32> to vector<1x208xf32>
    %cst_37 = arith.constant 0.000000e+00 : f32
    %225 = vector.broadcast %cst_37 : f32 to vector<1x48xf32>
    %226 = tpu.concatenate %224, %225 in 1 : vector<1x208xf32>, vector<1x48xf32> -> vector<1x256xf32>
    %227 = vector.broadcast %223 : f32 to vector<1x256xf32>
    %228 = arith.mulf %227, %226 : vector<1x256xf32>
    %229 = arith.addf %215, %228 : vector<1x256xf32>
    %c92 = arith.constant 92 : index
    %230 = memref.load %arg2[%c92] : memref<98xf32, #tpu.memory_space<smem>>
    %231 = vector.extract_strided_slice %144 {offsets = [0, 48], sizes = [1, 208], strides = [1, 1]} : vector<1x256xf32> to vector<1x208xf32>
    %cst_38 = arith.constant 0.000000e+00 : f32
    %232 = vector.broadcast %cst_38 : f32 to vector<1x48xf32>
    %233 = tpu.concatenate %231, %232 in 1 : vector<1x208xf32>, vector<1x48xf32> -> vector<1x256xf32>
    %234 = vector.broadcast %230 : f32 to vector<1x256xf32>
    %235 = arith.mulf %234, %233 : vector<1x256xf32>
    %236 = arith.addf %222, %235 : vector<1x256xf32>
    %cst_39 = arith.constant 0.000000e+00 : f32
    %237 = vector.broadcast %cst_39 : f32 to vector<1x1xf32>
    %238 = vector.extract_strided_slice %5 {offsets = [0, 0], sizes = [1, 255], strides = [1, 1]} : vector<1x256xf32> to vector<1x255xf32>
    %239 = tpu.concatenate %237, %238 in 1 : vector<1x1xf32>, vector<1x255xf32> -> vector<1x256xf32>
    %cst_40 = arith.constant 0.000000e+00 : f32
    %240 = vector.broadcast %cst_40 : f32 to vector<1x1xf32>
    %241 = vector.extract_strided_slice %7 {offsets = [0, 0], sizes = [1, 255], strides = [1, 1]} : vector<1x256xf32> to vector<1x255xf32>
    %242 = tpu.concatenate %240, %241 in 1 : vector<1x1xf32>, vector<1x255xf32> -> vector<1x256xf32>
    %c-1_i32 = arith.constant -1 : i32
    %243 = vector.broadcast %c-1_i32 : i32 to vector<1x256xi32>
    %244 = arith.addi %12, %243 : vector<1x256xi32>
    %c0_i32_41 = arith.constant 0 : i32
    %245 = vector.broadcast %c0_i32_41 : i32 to vector<1x256xi32>
    %246 = arith.cmpi sge, %244, %245 : vector<1x256xi32>
    %c-1_i32_42 = arith.constant -1 : i32
    %247 = vector.broadcast %c-1_i32_42 : i32 to vector<1x256xi32>
    %248 = arith.addi %12, %247 : vector<1x256xi32>
    %c16_i32_43 = arith.constant 16 : i32
    %249 = vector.broadcast %c16_i32_43 : i32 to vector<1x256xi32>
    %250 = arith.cmpi slt, %248, %249 : vector<1x256xi32>
    %251 = arith.andi %246, %250 : vector<1x256xi1>
    %252 = arith.extui %251 : vector<1x256xi1> to vector<1x256xi32>
    %253 = arith.sitofp %252 : vector<1x256xi32> to vector<1x256xf32>
    %254 = arith.mulf %239, %253 : vector<1x256xf32>
    %255 = arith.mulf %242, %253 : vector<1x256xf32>
    %c2 = arith.constant 2 : index
    %256 = memref.load %arg2[%c2] : memref<98xf32, #tpu.memory_space<smem>>
    %cst_44 = arith.constant 0.000000e+00 : f32
    %257 = vector.broadcast %cst_44 : f32 to vector<1x48xf32>
    %258 = vector.extract_strided_slice %254 {offsets = [0, 0], sizes = [1, 208], strides = [1, 1]} : vector<1x256xf32> to vector<1x208xf32>
    %259 = tpu.concatenate %257, %258 in 1 : vector<1x48xf32>, vector<1x208xf32> -> vector<1x256xf32>
    %260 = vector.broadcast %256 : f32 to vector<1x256xf32>
    %261 = arith.mulf %260, %259 : vector<1x256xf32>
    %262 = arith.addf %229, %261 : vector<1x256xf32>
    %c51 = arith.constant 51 : index
    %263 = memref.load %arg2[%c51] : memref<98xf32, #tpu.memory_space<smem>>
    %cst_45 = arith.constant 0.000000e+00 : f32
    %264 = vector.broadcast %cst_45 : f32 to vector<1x48xf32>
    %265 = vector.extract_strided_slice %255 {offsets = [0, 0], sizes = [1, 208], strides = [1, 1]} : vector<1x256xf32> to vector<1x208xf32>
    %266 = tpu.concatenate %264, %265 in 1 : vector<1x48xf32>, vector<1x208xf32> -> vector<1x256xf32>
    %267 = vector.broadcast %263 : f32 to vector<1x256xf32>
    %268 = arith.mulf %267, %266 : vector<1x256xf32>
    %269 = arith.addf %236, %268 : vector<1x256xf32>
    %c9 = arith.constant 9 : index
    %270 = memref.load %arg2[%c9] : memref<98xf32, #tpu.memory_space<smem>>
    %cst_46 = arith.constant 0.000000e+00 : f32
    %271 = vector.broadcast %cst_46 : f32 to vector<1x32xf32>
    %272 = vector.extract_strided_slice %254 {offsets = [0, 0], sizes = [1, 224], strides = [1, 1]} : vector<1x256xf32> to vector<1x224xf32>
    %273 = tpu.concatenate %271, %272 in 1 : vector<1x32xf32>, vector<1x224xf32> -> vector<1x256xf32>
    %274 = vector.broadcast %270 : f32 to vector<1x256xf32>
    %275 = arith.mulf %274, %273 : vector<1x256xf32>
    %276 = arith.addf %262, %275 : vector<1x256xf32>
    %c58 = arith.constant 58 : index
    %277 = memref.load %arg2[%c58] : memref<98xf32, #tpu.memory_space<smem>>
    %cst_47 = arith.constant 0.000000e+00 : f32
    %278 = vector.broadcast %cst_47 : f32 to vector<1x32xf32>
    %279 = vector.extract_strided_slice %255 {offsets = [0, 0], sizes = [1, 224], strides = [1, 1]} : vector<1x256xf32> to vector<1x224xf32>
    %280 = tpu.concatenate %278, %279 in 1 : vector<1x32xf32>, vector<1x224xf32> -> vector<1x256xf32>
    %281 = vector.broadcast %277 : f32 to vector<1x256xf32>
    %282 = arith.mulf %281, %280 : vector<1x256xf32>
    %283 = arith.addf %269, %282 : vector<1x256xf32>
    %c16 = arith.constant 16 : index
    %284 = memref.load %arg2[%c16] : memref<98xf32, #tpu.memory_space<smem>>
    %cst_48 = arith.constant 0.000000e+00 : f32
    %285 = vector.broadcast %cst_48 : f32 to vector<1x16xf32>
    %286 = vector.extract_strided_slice %254 {offsets = [0, 0], sizes = [1, 240], strides = [1, 1]} : vector<1x256xf32> to vector<1x240xf32>
    %287 = tpu.concatenate %285, %286 in 1 : vector<1x16xf32>, vector<1x240xf32> -> vector<1x256xf32>
    %288 = vector.broadcast %284 : f32 to vector<1x256xf32>
    %289 = arith.mulf %288, %287 : vector<1x256xf32>
    %290 = arith.addf %276, %289 : vector<1x256xf32>
    %c65 = arith.constant 65 : index
    %291 = memref.load %arg2[%c65] : memref<98xf32, #tpu.memory_space<smem>>
    %cst_49 = arith.constant 0.000000e+00 : f32
    %292 = vector.broadcast %cst_49 : f32 to vector<1x16xf32>
    %293 = vector.extract_strided_slice %255 {offsets = [0, 0], sizes = [1, 240], strides = [1, 1]} : vector<1x256xf32> to vector<1x240xf32>
    %294 = tpu.concatenate %292, %293 in 1 : vector<1x16xf32>, vector<1x240xf32> -> vector<1x256xf32>
    %295 = vector.broadcast %291 : f32 to vector<1x256xf32>
    %296 = arith.mulf %295, %294 : vector<1x256xf32>
    %297 = arith.addf %283, %296 : vector<1x256xf32>
    %c23 = arith.constant 23 : index
    %298 = memref.load %arg2[%c23] : memref<98xf32, #tpu.memory_space<smem>>
    %299 = vector.broadcast %298 : f32 to vector<1x256xf32>
    %300 = arith.mulf %299, %254 : vector<1x256xf32>
    %301 = arith.addf %290, %300 : vector<1x256xf32>
    %c72 = arith.constant 72 : index
    %302 = memref.load %arg2[%c72] : memref<98xf32, #tpu.memory_space<smem>>
    %303 = vector.broadcast %302 : f32 to vector<1x256xf32>
    %304 = arith.mulf %303, %255 : vector<1x256xf32>
    %305 = arith.addf %297, %304 : vector<1x256xf32>
    %c30 = arith.constant 30 : index
    %306 = memref.load %arg2[%c30] : memref<98xf32, #tpu.memory_space<smem>>
    %307 = vector.extract_strided_slice %254 {offsets = [0, 16], sizes = [1, 240], strides = [1, 1]} : vector<1x256xf32> to vector<1x240xf32>
    %cst_50 = arith.constant 0.000000e+00 : f32
    %308 = vector.broadcast %cst_50 : f32 to vector<1x16xf32>
    %309 = tpu.concatenate %307, %308 in 1 : vector<1x240xf32>, vector<1x16xf32> -> vector<1x256xf32>
    %310 = vector.broadcast %306 : f32 to vector<1x256xf32>
    %311 = arith.mulf %310, %309 : vector<1x256xf32>
    %312 = arith.addf %301, %311 : vector<1x256xf32>
    %c79 = arith.constant 79 : index
    %313 = memref.load %arg2[%c79] : memref<98xf32, #tpu.memory_space<smem>>
    %314 = vector.extract_strided_slice %255 {offsets = [0, 16], sizes = [1, 240], strides = [1, 1]} : vector<1x256xf32> to vector<1x240xf32>
    %cst_51 = arith.constant 0.000000e+00 : f32
    %315 = vector.broadcast %cst_51 : f32 to vector<1x16xf32>
    %316 = tpu.concatenate %314, %315 in 1 : vector<1x240xf32>, vector<1x16xf32> -> vector<1x256xf32>
    %317 = vector.broadcast %313 : f32 to vector<1x256xf32>
    %318 = arith.mulf %317, %316 : vector<1x256xf32>
    %319 = arith.addf %305, %318 : vector<1x256xf32>
    %c37 = arith.constant 37 : index
    %320 = memref.load %arg2[%c37] : memref<98xf32, #tpu.memory_space<smem>>
    %321 = vector.extract_strided_slice %254 {offsets = [0, 32], sizes = [1, 224], strides = [1, 1]} : vector<1x256xf32> to vector<1x224xf32>
    %cst_52 = arith.constant 0.000000e+00 : f32
    %322 = vector.broadcast %cst_52 : f32 to vector<1x32xf32>
    %323 = tpu.concatenate %321, %322 in 1 : vector<1x224xf32>, vector<1x32xf32> -> vector<1x256xf32>
    %324 = vector.broadcast %320 : f32 to vector<1x256xf32>
    %325 = arith.mulf %324, %323 : vector<1x256xf32>
    %326 = arith.addf %312, %325 : vector<1x256xf32>
    %c86 = arith.constant 86 : index
    %327 = memref.load %arg2[%c86] : memref<98xf32, #tpu.memory_space<smem>>
    %328 = vector.extract_strided_slice %255 {offsets = [0, 32], sizes = [1, 224], strides = [1, 1]} : vector<1x256xf32> to vector<1x224xf32>
    %cst_53 = arith.constant 0.000000e+00 : f32
    %329 = vector.broadcast %cst_53 : f32 to vector<1x32xf32>
    %330 = tpu.concatenate %328, %329 in 1 : vector<1x224xf32>, vector<1x32xf32> -> vector<1x256xf32>
    %331 = vector.broadcast %327 : f32 to vector<1x256xf32>
    %332 = arith.mulf %331, %330 : vector<1x256xf32>
    %333 = arith.addf %319, %332 : vector<1x256xf32>
    %c44 = arith.constant 44 : index
    %334 = memref.load %arg2[%c44] : memref<98xf32, #tpu.memory_space<smem>>
    %335 = vector.extract_strided_slice %254 {offsets = [0, 48], sizes = [1, 208], strides = [1, 1]} : vector<1x256xf32> to vector<1x208xf32>
    %cst_54 = arith.constant 0.000000e+00 : f32
    %336 = vector.broadcast %cst_54 : f32 to vector<1x48xf32>
    %337 = tpu.concatenate %335, %336 in 1 : vector<1x208xf32>, vector<1x48xf32> -> vector<1x256xf32>
    %338 = vector.broadcast %334 : f32 to vector<1x256xf32>
    %339 = arith.mulf %338, %337 : vector<1x256xf32>
    %340 = arith.addf %326, %339 : vector<1x256xf32>
    %c93 = arith.constant 93 : index
    %341 = memref.load %arg2[%c93] : memref<98xf32, #tpu.memory_space<smem>>
    %342 = vector.extract_strided_slice %255 {offsets = [0, 48], sizes = [1, 208], strides = [1, 1]} : vector<1x256xf32> to vector<1x208xf32>
    %cst_55 = arith.constant 0.000000e+00 : f32
    %343 = vector.broadcast %cst_55 : f32 to vector<1x48xf32>
    %344 = tpu.concatenate %342, %343 in 1 : vector<1x208xf32>, vector<1x48xf32> -> vector<1x256xf32>
    %345 = vector.broadcast %341 : f32 to vector<1x256xf32>
    %346 = arith.mulf %345, %344 : vector<1x256xf32>
    %347 = arith.addf %333, %346 : vector<1x256xf32>
    %c3 = arith.constant 3 : index
    %348 = memref.load %arg2[%c3] : memref<98xf32, #tpu.memory_space<smem>>
    %cst_56 = arith.constant 0.000000e+00 : f32
    %349 = vector.broadcast %cst_56 : f32 to vector<1x48xf32>
    %350 = vector.extract_strided_slice %5 {offsets = [0, 0], sizes = [1, 208], strides = [1, 1]} : vector<1x256xf32> to vector<1x208xf32>
    %351 = tpu.concatenate %349, %350 in 1 : vector<1x48xf32>, vector<1x208xf32> -> vector<1x256xf32>
    %352 = vector.broadcast %348 : f32 to vector<1x256xf32>
    %353 = arith.mulf %352, %351 : vector<1x256xf32>
    %354 = arith.addf %340, %353 : vector<1x256xf32>
    %c52 = arith.constant 52 : index
    %355 = memref.load %arg2[%c52] : memref<98xf32, #tpu.memory_space<smem>>
    %cst_57 = arith.constant 0.000000e+00 : f32
    %356 = vector.broadcast %cst_57 : f32 to vector<1x48xf32>
    %357 = vector.extract_strided_slice %7 {offsets = [0, 0], sizes = [1, 208], strides = [1, 1]} : vector<1x256xf32> to vector<1x208xf32>
    %358 = tpu.concatenate %356, %357 in 1 : vector<1x48xf32>, vector<1x208xf32> -> vector<1x256xf32>
    %359 = vector.broadcast %355 : f32 to vector<1x256xf32>
    %360 = arith.mulf %359, %358 : vector<1x256xf32>
    %361 = arith.addf %347, %360 : vector<1x256xf32>
    %c10 = arith.constant 10 : index
    %362 = memref.load %arg2[%c10] : memref<98xf32, #tpu.memory_space<smem>>
    %cst_58 = arith.constant 0.000000e+00 : f32
    %363 = vector.broadcast %cst_58 : f32 to vector<1x32xf32>
    %364 = vector.extract_strided_slice %5 {offsets = [0, 0], sizes = [1, 224], strides = [1, 1]} : vector<1x256xf32> to vector<1x224xf32>
    %365 = tpu.concatenate %363, %364 in 1 : vector<1x32xf32>, vector<1x224xf32> -> vector<1x256xf32>
    %366 = vector.broadcast %362 : f32 to vector<1x256xf32>
    %367 = arith.mulf %366, %365 : vector<1x256xf32>
    %368 = arith.addf %354, %367 : vector<1x256xf32>
    %c59 = arith.constant 59 : index
    %369 = memref.load %arg2[%c59] : memref<98xf32, #tpu.memory_space<smem>>
    %cst_59 = arith.constant 0.000000e+00 : f32
    %370 = vector.broadcast %cst_59 : f32 to vector<1x32xf32>
    %371 = vector.extract_strided_slice %7 {offsets = [0, 0], sizes = [1, 224], strides = [1, 1]} : vector<1x256xf32> to vector<1x224xf32>
    %372 = tpu.concatenate %370, %371 in 1 : vector<1x32xf32>, vector<1x224xf32> -> vector<1x256xf32>
    %373 = vector.broadcast %369 : f32 to vector<1x256xf32>
    %374 = arith.mulf %373, %372 : vector<1x256xf32>
    %375 = arith.addf %361, %374 : vector<1x256xf32>
    %c17 = arith.constant 17 : index
    %376 = memref.load %arg2[%c17] : memref<98xf32, #tpu.memory_space<smem>>
    %cst_60 = arith.constant 0.000000e+00 : f32
    %377 = vector.broadcast %cst_60 : f32 to vector<1x16xf32>
    %378 = vector.extract_strided_slice %5 {offsets = [0, 0], sizes = [1, 240], strides = [1, 1]} : vector<1x256xf32> to vector<1x240xf32>
    %379 = tpu.concatenate %377, %378 in 1 : vector<1x16xf32>, vector<1x240xf32> -> vector<1x256xf32>
    %380 = vector.broadcast %376 : f32 to vector<1x256xf32>
    %381 = arith.mulf %380, %379 : vector<1x256xf32>
    %382 = arith.addf %368, %381 : vector<1x256xf32>
    %c66 = arith.constant 66 : index
    %383 = memref.load %arg2[%c66] : memref<98xf32, #tpu.memory_space<smem>>
    %cst_61 = arith.constant 0.000000e+00 : f32
    %384 = vector.broadcast %cst_61 : f32 to vector<1x16xf32>
    %385 = vector.extract_strided_slice %7 {offsets = [0, 0], sizes = [1, 240], strides = [1, 1]} : vector<1x256xf32> to vector<1x240xf32>
    %386 = tpu.concatenate %384, %385 in 1 : vector<1x16xf32>, vector<1x240xf32> -> vector<1x256xf32>
    %387 = vector.broadcast %383 : f32 to vector<1x256xf32>
    %388 = arith.mulf %387, %386 : vector<1x256xf32>
    %389 = arith.addf %375, %388 : vector<1x256xf32>
    %c24 = arith.constant 24 : index
    %390 = memref.load %arg2[%c24] : memref<98xf32, #tpu.memory_space<smem>>
    %391 = vector.broadcast %390 : f32 to vector<1x256xf32>
    %392 = arith.mulf %391, %5 : vector<1x256xf32>
    %393 = arith.addf %382, %392 : vector<1x256xf32>
    %c73 = arith.constant 73 : index
    %394 = memref.load %arg2[%c73] : memref<98xf32, #tpu.memory_space<smem>>
    %395 = vector.broadcast %394 : f32 to vector<1x256xf32>
    %396 = arith.mulf %395, %7 : vector<1x256xf32>
    %397 = arith.addf %389, %396 : vector<1x256xf32>
    %c31 = arith.constant 31 : index
    %398 = memref.load %arg2[%c31] : memref<98xf32, #tpu.memory_space<smem>>
    %399 = vector.extract_strided_slice %5 {offsets = [0, 16], sizes = [1, 240], strides = [1, 1]} : vector<1x256xf32> to vector<1x240xf32>
    %cst_62 = arith.constant 0.000000e+00 : f32
    %400 = vector.broadcast %cst_62 : f32 to vector<1x16xf32>
    %401 = tpu.concatenate %399, %400 in 1 : vector<1x240xf32>, vector<1x16xf32> -> vector<1x256xf32>
    %402 = vector.broadcast %398 : f32 to vector<1x256xf32>
    %403 = arith.mulf %402, %401 : vector<1x256xf32>
    %404 = arith.addf %393, %403 : vector<1x256xf32>
    %c80 = arith.constant 80 : index
    %405 = memref.load %arg2[%c80] : memref<98xf32, #tpu.memory_space<smem>>
    %406 = vector.extract_strided_slice %7 {offsets = [0, 16], sizes = [1, 240], strides = [1, 1]} : vector<1x256xf32> to vector<1x240xf32>
    %cst_63 = arith.constant 0.000000e+00 : f32
    %407 = vector.broadcast %cst_63 : f32 to vector<1x16xf32>
    %408 = tpu.concatenate %406, %407 in 1 : vector<1x240xf32>, vector<1x16xf32> -> vector<1x256xf32>
    %409 = vector.broadcast %405 : f32 to vector<1x256xf32>
    %410 = arith.mulf %409, %408 : vector<1x256xf32>
    %411 = arith.addf %397, %410 : vector<1x256xf32>
    %c38 = arith.constant 38 : index
    %412 = memref.load %arg2[%c38] : memref<98xf32, #tpu.memory_space<smem>>
    %413 = vector.extract_strided_slice %5 {offsets = [0, 32], sizes = [1, 224], strides = [1, 1]} : vector<1x256xf32> to vector<1x224xf32>
    %cst_64 = arith.constant 0.000000e+00 : f32
    %414 = vector.broadcast %cst_64 : f32 to vector<1x32xf32>
    %415 = tpu.concatenate %413, %414 in 1 : vector<1x224xf32>, vector<1x32xf32> -> vector<1x256xf32>
    %416 = vector.broadcast %412 : f32 to vector<1x256xf32>
    %417 = arith.mulf %416, %415 : vector<1x256xf32>
    %418 = arith.addf %404, %417 : vector<1x256xf32>
    %c87 = arith.constant 87 : index
    %419 = memref.load %arg2[%c87] : memref<98xf32, #tpu.memory_space<smem>>
    %420 = vector.extract_strided_slice %7 {offsets = [0, 32], sizes = [1, 224], strides = [1, 1]} : vector<1x256xf32> to vector<1x224xf32>
    %cst_65 = arith.constant 0.000000e+00 : f32
    %421 = vector.broadcast %cst_65 : f32 to vector<1x32xf32>
    %422 = tpu.concatenate %420, %421 in 1 : vector<1x224xf32>, vector<1x32xf32> -> vector<1x256xf32>
    %423 = vector.broadcast %419 : f32 to vector<1x256xf32>
    %424 = arith.mulf %423, %422 : vector<1x256xf32>
    %425 = arith.addf %411, %424 : vector<1x256xf32>
    %c45 = arith.constant 45 : index
    %426 = memref.load %arg2[%c45] : memref<98xf32, #tpu.memory_space<smem>>
    %427 = vector.extract_strided_slice %5 {offsets = [0, 48], sizes = [1, 208], strides = [1, 1]} : vector<1x256xf32> to vector<1x208xf32>
    %cst_66 = arith.constant 0.000000e+00 : f32
    %428 = vector.broadcast %cst_66 : f32 to vector<1x48xf32>
    %429 = tpu.concatenate %427, %428 in 1 : vector<1x208xf32>, vector<1x48xf32> -> vector<1x256xf32>
    %430 = vector.broadcast %426 : f32 to vector<1x256xf32>
    %431 = arith.mulf %430, %429 : vector<1x256xf32>
    %432 = arith.addf %418, %431 : vector<1x256xf32>
    %c94 = arith.constant 94 : index
    %433 = memref.load %arg2[%c94] : memref<98xf32, #tpu.memory_space<smem>>
    %434 = vector.extract_strided_slice %7 {offsets = [0, 48], sizes = [1, 208], strides = [1, 1]} : vector<1x256xf32> to vector<1x208xf32>
    %cst_67 = arith.constant 0.000000e+00 : f32
    %435 = vector.broadcast %cst_67 : f32 to vector<1x48xf32>
    %436 = tpu.concatenate %434, %435 in 1 : vector<1x208xf32>, vector<1x48xf32> -> vector<1x256xf32>
    %437 = vector.broadcast %433 : f32 to vector<1x256xf32>
    %438 = arith.mulf %437, %436 : vector<1x256xf32>
    %439 = arith.addf %425, %438 : vector<1x256xf32>
    %440 = vector.extract_strided_slice %5 {offsets = [0, 1], sizes = [1, 255], strides = [1, 1]} : vector<1x256xf32> to vector<1x255xf32>
    %cst_68 = arith.constant 0.000000e+00 : f32
    %441 = vector.broadcast %cst_68 : f32 to vector<1x1xf32>
    %442 = tpu.concatenate %440, %441 in 1 : vector<1x255xf32>, vector<1x1xf32> -> vector<1x256xf32>
    %443 = vector.extract_strided_slice %7 {offsets = [0, 1], sizes = [1, 255], strides = [1, 1]} : vector<1x256xf32> to vector<1x255xf32>
    %cst_69 = arith.constant 0.000000e+00 : f32
    %444 = vector.broadcast %cst_69 : f32 to vector<1x1xf32>
    %445 = tpu.concatenate %443, %444 in 1 : vector<1x255xf32>, vector<1x1xf32> -> vector<1x256xf32>
    %c1_i32 = arith.constant 1 : i32
    %446 = vector.broadcast %c1_i32 : i32 to vector<1x256xi32>
    %447 = arith.addi %12, %446 : vector<1x256xi32>
    %c0_i32_70 = arith.constant 0 : i32
    %448 = vector.broadcast %c0_i32_70 : i32 to vector<1x256xi32>
    %449 = arith.cmpi sge, %447, %448 : vector<1x256xi32>
    %c1_i32_71 = arith.constant 1 : i32
    %450 = vector.broadcast %c1_i32_71 : i32 to vector<1x256xi32>
    %451 = arith.addi %12, %450 : vector<1x256xi32>
    %c16_i32_72 = arith.constant 16 : i32
    %452 = vector.broadcast %c16_i32_72 : i32 to vector<1x256xi32>
    %453 = arith.cmpi slt, %451, %452 : vector<1x256xi32>
    %454 = arith.andi %449, %453 : vector<1x256xi1>
    %455 = arith.extui %454 : vector<1x256xi1> to vector<1x256xi32>
    %456 = arith.sitofp %455 : vector<1x256xi32> to vector<1x256xf32>
    %457 = arith.mulf %442, %456 : vector<1x256xf32>
    %458 = arith.mulf %445, %456 : vector<1x256xf32>
    %c4 = arith.constant 4 : index
    %459 = memref.load %arg2[%c4] : memref<98xf32, #tpu.memory_space<smem>>
    %cst_73 = arith.constant 0.000000e+00 : f32
    %460 = vector.broadcast %cst_73 : f32 to vector<1x48xf32>
    %461 = vector.extract_strided_slice %457 {offsets = [0, 0], sizes = [1, 208], strides = [1, 1]} : vector<1x256xf32> to vector<1x208xf32>
    %462 = tpu.concatenate %460, %461 in 1 : vector<1x48xf32>, vector<1x208xf32> -> vector<1x256xf32>
    %463 = vector.broadcast %459 : f32 to vector<1x256xf32>
    %464 = arith.mulf %463, %462 : vector<1x256xf32>
    %465 = arith.addf %432, %464 : vector<1x256xf32>
    %c53 = arith.constant 53 : index
    %466 = memref.load %arg2[%c53] : memref<98xf32, #tpu.memory_space<smem>>
    %cst_74 = arith.constant 0.000000e+00 : f32
    %467 = vector.broadcast %cst_74 : f32 to vector<1x48xf32>
    %468 = vector.extract_strided_slice %458 {offsets = [0, 0], sizes = [1, 208], strides = [1, 1]} : vector<1x256xf32> to vector<1x208xf32>
    %469 = tpu.concatenate %467, %468 in 1 : vector<1x48xf32>, vector<1x208xf32> -> vector<1x256xf32>
    %470 = vector.broadcast %466 : f32 to vector<1x256xf32>
    %471 = arith.mulf %470, %469 : vector<1x256xf32>
    %472 = arith.addf %439, %471 : vector<1x256xf32>
    %c11 = arith.constant 11 : index
    %473 = memref.load %arg2[%c11] : memref<98xf32, #tpu.memory_space<smem>>
    %cst_75 = arith.constant 0.000000e+00 : f32
    %474 = vector.broadcast %cst_75 : f32 to vector<1x32xf32>
    %475 = vector.extract_strided_slice %457 {offsets = [0, 0], sizes = [1, 224], strides = [1, 1]} : vector<1x256xf32> to vector<1x224xf32>
    %476 = tpu.concatenate %474, %475 in 1 : vector<1x32xf32>, vector<1x224xf32> -> vector<1x256xf32>
    %477 = vector.broadcast %473 : f32 to vector<1x256xf32>
    %478 = arith.mulf %477, %476 : vector<1x256xf32>
    %479 = arith.addf %465, %478 : vector<1x256xf32>
    %c60 = arith.constant 60 : index
    %480 = memref.load %arg2[%c60] : memref<98xf32, #tpu.memory_space<smem>>
    %cst_76 = arith.constant 0.000000e+00 : f32
    %481 = vector.broadcast %cst_76 : f32 to vector<1x32xf32>
    %482 = vector.extract_strided_slice %458 {offsets = [0, 0], sizes = [1, 224], strides = [1, 1]} : vector<1x256xf32> to vector<1x224xf32>
    %483 = tpu.concatenate %481, %482 in 1 : vector<1x32xf32>, vector<1x224xf32> -> vector<1x256xf32>
    %484 = vector.broadcast %480 : f32 to vector<1x256xf32>
    %485 = arith.mulf %484, %483 : vector<1x256xf32>
    %486 = arith.addf %472, %485 : vector<1x256xf32>
    %c18 = arith.constant 18 : index
    %487 = memref.load %arg2[%c18] : memref<98xf32, #tpu.memory_space<smem>>
    %cst_77 = arith.constant 0.000000e+00 : f32
    %488 = vector.broadcast %cst_77 : f32 to vector<1x16xf32>
    %489 = vector.extract_strided_slice %457 {offsets = [0, 0], sizes = [1, 240], strides = [1, 1]} : vector<1x256xf32> to vector<1x240xf32>
    %490 = tpu.concatenate %488, %489 in 1 : vector<1x16xf32>, vector<1x240xf32> -> vector<1x256xf32>
    %491 = vector.broadcast %487 : f32 to vector<1x256xf32>
    %492 = arith.mulf %491, %490 : vector<1x256xf32>
    %493 = arith.addf %479, %492 : vector<1x256xf32>
    %c67 = arith.constant 67 : index
    %494 = memref.load %arg2[%c67] : memref<98xf32, #tpu.memory_space<smem>>
    %cst_78 = arith.constant 0.000000e+00 : f32
    %495 = vector.broadcast %cst_78 : f32 to vector<1x16xf32>
    %496 = vector.extract_strided_slice %458 {offsets = [0, 0], sizes = [1, 240], strides = [1, 1]} : vector<1x256xf32> to vector<1x240xf32>
    %497 = tpu.concatenate %495, %496 in 1 : vector<1x16xf32>, vector<1x240xf32> -> vector<1x256xf32>
    %498 = vector.broadcast %494 : f32 to vector<1x256xf32>
    %499 = arith.mulf %498, %497 : vector<1x256xf32>
    %500 = arith.addf %486, %499 : vector<1x256xf32>
    %c25 = arith.constant 25 : index
    %501 = memref.load %arg2[%c25] : memref<98xf32, #tpu.memory_space<smem>>
    %502 = vector.broadcast %501 : f32 to vector<1x256xf32>
    %503 = arith.mulf %502, %457 : vector<1x256xf32>
    %504 = arith.addf %493, %503 : vector<1x256xf32>
    %c74 = arith.constant 74 : index
    %505 = memref.load %arg2[%c74] : memref<98xf32, #tpu.memory_space<smem>>
    %506 = vector.broadcast %505 : f32 to vector<1x256xf32>
    %507 = arith.mulf %506, %458 : vector<1x256xf32>
    %508 = arith.addf %500, %507 : vector<1x256xf32>
    %c32 = arith.constant 32 : index
    %509 = memref.load %arg2[%c32] : memref<98xf32, #tpu.memory_space<smem>>
    %510 = vector.extract_strided_slice %457 {offsets = [0, 16], sizes = [1, 240], strides = [1, 1]} : vector<1x256xf32> to vector<1x240xf32>
    %cst_79 = arith.constant 0.000000e+00 : f32
    %511 = vector.broadcast %cst_79 : f32 to vector<1x16xf32>
    %512 = tpu.concatenate %510, %511 in 1 : vector<1x240xf32>, vector<1x16xf32> -> vector<1x256xf32>
    %513 = vector.broadcast %509 : f32 to vector<1x256xf32>
    %514 = arith.mulf %513, %512 : vector<1x256xf32>
    %515 = arith.addf %504, %514 : vector<1x256xf32>
    %c81 = arith.constant 81 : index
    %516 = memref.load %arg2[%c81] : memref<98xf32, #tpu.memory_space<smem>>
    %517 = vector.extract_strided_slice %458 {offsets = [0, 16], sizes = [1, 240], strides = [1, 1]} : vector<1x256xf32> to vector<1x240xf32>
    %cst_80 = arith.constant 0.000000e+00 : f32
    %518 = vector.broadcast %cst_80 : f32 to vector<1x16xf32>
    %519 = tpu.concatenate %517, %518 in 1 : vector<1x240xf32>, vector<1x16xf32> -> vector<1x256xf32>
    %520 = vector.broadcast %516 : f32 to vector<1x256xf32>
    %521 = arith.mulf %520, %519 : vector<1x256xf32>
    %522 = arith.addf %508, %521 : vector<1x256xf32>
    %c39 = arith.constant 39 : index
    %523 = memref.load %arg2[%c39] : memref<98xf32, #tpu.memory_space<smem>>
    %524 = vector.extract_strided_slice %457 {offsets = [0, 32], sizes = [1, 224], strides = [1, 1]} : vector<1x256xf32> to vector<1x224xf32>
    %cst_81 = arith.constant 0.000000e+00 : f32
    %525 = vector.broadcast %cst_81 : f32 to vector<1x32xf32>
    %526 = tpu.concatenate %524, %525 in 1 : vector<1x224xf32>, vector<1x32xf32> -> vector<1x256xf32>
    %527 = vector.broadcast %523 : f32 to vector<1x256xf32>
    %528 = arith.mulf %527, %526 : vector<1x256xf32>
    %529 = arith.addf %515, %528 : vector<1x256xf32>
    %c88 = arith.constant 88 : index
    %530 = memref.load %arg2[%c88] : memref<98xf32, #tpu.memory_space<smem>>
    %531 = vector.extract_strided_slice %458 {offsets = [0, 32], sizes = [1, 224], strides = [1, 1]} : vector<1x256xf32> to vector<1x224xf32>
    %cst_82 = arith.constant 0.000000e+00 : f32
    %532 = vector.broadcast %cst_82 : f32 to vector<1x32xf32>
    %533 = tpu.concatenate %531, %532 in 1 : vector<1x224xf32>, vector<1x32xf32> -> vector<1x256xf32>
    %534 = vector.broadcast %530 : f32 to vector<1x256xf32>
    %535 = arith.mulf %534, %533 : vector<1x256xf32>
    %536 = arith.addf %522, %535 : vector<1x256xf32>
    %c46 = arith.constant 46 : index
    %537 = memref.load %arg2[%c46] : memref<98xf32, #tpu.memory_space<smem>>
    %538 = vector.extract_strided_slice %457 {offsets = [0, 48], sizes = [1, 208], strides = [1, 1]} : vector<1x256xf32> to vector<1x208xf32>
    %cst_83 = arith.constant 0.000000e+00 : f32
    %539 = vector.broadcast %cst_83 : f32 to vector<1x48xf32>
    %540 = tpu.concatenate %538, %539 in 1 : vector<1x208xf32>, vector<1x48xf32> -> vector<1x256xf32>
    %541 = vector.broadcast %537 : f32 to vector<1x256xf32>
    %542 = arith.mulf %541, %540 : vector<1x256xf32>
    %543 = arith.addf %529, %542 : vector<1x256xf32>
    %c95 = arith.constant 95 : index
    %544 = memref.load %arg2[%c95] : memref<98xf32, #tpu.memory_space<smem>>
    %545 = vector.extract_strided_slice %458 {offsets = [0, 48], sizes = [1, 208], strides = [1, 1]} : vector<1x256xf32> to vector<1x208xf32>
    %cst_84 = arith.constant 0.000000e+00 : f32
    %546 = vector.broadcast %cst_84 : f32 to vector<1x48xf32>
    %547 = tpu.concatenate %545, %546 in 1 : vector<1x208xf32>, vector<1x48xf32> -> vector<1x256xf32>
    %548 = vector.broadcast %544 : f32 to vector<1x256xf32>
    %549 = arith.mulf %548, %547 : vector<1x256xf32>
    %550 = arith.addf %536, %549 : vector<1x256xf32>
    %551 = vector.extract_strided_slice %5 {offsets = [0, 2], sizes = [1, 254], strides = [1, 1]} : vector<1x256xf32> to vector<1x254xf32>
    %cst_85 = arith.constant 0.000000e+00 : f32
    %552 = vector.broadcast %cst_85 : f32 to vector<1x2xf32>
    %553 = tpu.concatenate %551, %552 in 1 : vector<1x254xf32>, vector<1x2xf32> -> vector<1x256xf32>
    %554 = vector.extract_strided_slice %7 {offsets = [0, 2], sizes = [1, 254], strides = [1, 1]} : vector<1x256xf32> to vector<1x254xf32>
    %cst_86 = arith.constant 0.000000e+00 : f32
    %555 = vector.broadcast %cst_86 : f32 to vector<1x2xf32>
    %556 = tpu.concatenate %554, %555 in 1 : vector<1x254xf32>, vector<1x2xf32> -> vector<1x256xf32>
    %c2_i32 = arith.constant 2 : i32
    %557 = vector.broadcast %c2_i32 : i32 to vector<1x256xi32>
    %558 = arith.addi %12, %557 : vector<1x256xi32>
    %c0_i32_87 = arith.constant 0 : i32
    %559 = vector.broadcast %c0_i32_87 : i32 to vector<1x256xi32>
    %560 = arith.cmpi sge, %558, %559 : vector<1x256xi32>
    %c2_i32_88 = arith.constant 2 : i32
    %561 = vector.broadcast %c2_i32_88 : i32 to vector<1x256xi32>
    %562 = arith.addi %12, %561 : vector<1x256xi32>
    %c16_i32_89 = arith.constant 16 : i32
    %563 = vector.broadcast %c16_i32_89 : i32 to vector<1x256xi32>
    %564 = arith.cmpi slt, %562, %563 : vector<1x256xi32>
    %565 = arith.andi %560, %564 : vector<1x256xi1>
    %566 = arith.extui %565 : vector<1x256xi1> to vector<1x256xi32>
    %567 = arith.sitofp %566 : vector<1x256xi32> to vector<1x256xf32>
    %568 = arith.mulf %553, %567 : vector<1x256xf32>
    %569 = arith.mulf %556, %567 : vector<1x256xf32>
    %c5 = arith.constant 5 : index
    %570 = memref.load %arg2[%c5] : memref<98xf32, #tpu.memory_space<smem>>
    %cst_90 = arith.constant 0.000000e+00 : f32
    %571 = vector.broadcast %cst_90 : f32 to vector<1x48xf32>
    %572 = vector.extract_strided_slice %568 {offsets = [0, 0], sizes = [1, 208], strides = [1, 1]} : vector<1x256xf32> to vector<1x208xf32>
    %573 = tpu.concatenate %571, %572 in 1 : vector<1x48xf32>, vector<1x208xf32> -> vector<1x256xf32>
    %574 = vector.broadcast %570 : f32 to vector<1x256xf32>
    %575 = arith.mulf %574, %573 : vector<1x256xf32>
    %576 = arith.addf %543, %575 : vector<1x256xf32>
    %c54 = arith.constant 54 : index
    %577 = memref.load %arg2[%c54] : memref<98xf32, #tpu.memory_space<smem>>
    %cst_91 = arith.constant 0.000000e+00 : f32
    %578 = vector.broadcast %cst_91 : f32 to vector<1x48xf32>
    %579 = vector.extract_strided_slice %569 {offsets = [0, 0], sizes = [1, 208], strides = [1, 1]} : vector<1x256xf32> to vector<1x208xf32>
    %580 = tpu.concatenate %578, %579 in 1 : vector<1x48xf32>, vector<1x208xf32> -> vector<1x256xf32>
    %581 = vector.broadcast %577 : f32 to vector<1x256xf32>
    %582 = arith.mulf %581, %580 : vector<1x256xf32>
    %583 = arith.addf %550, %582 : vector<1x256xf32>
    %c12 = arith.constant 12 : index
    %584 = memref.load %arg2[%c12] : memref<98xf32, #tpu.memory_space<smem>>
    %cst_92 = arith.constant 0.000000e+00 : f32
    %585 = vector.broadcast %cst_92 : f32 to vector<1x32xf32>
    %586 = vector.extract_strided_slice %568 {offsets = [0, 0], sizes = [1, 224], strides = [1, 1]} : vector<1x256xf32> to vector<1x224xf32>
    %587 = tpu.concatenate %585, %586 in 1 : vector<1x32xf32>, vector<1x224xf32> -> vector<1x256xf32>
    %588 = vector.broadcast %584 : f32 to vector<1x256xf32>
    %589 = arith.mulf %588, %587 : vector<1x256xf32>
    %590 = arith.addf %576, %589 : vector<1x256xf32>
    %c61 = arith.constant 61 : index
    %591 = memref.load %arg2[%c61] : memref<98xf32, #tpu.memory_space<smem>>
    %cst_93 = arith.constant 0.000000e+00 : f32
    %592 = vector.broadcast %cst_93 : f32 to vector<1x32xf32>
    %593 = vector.extract_strided_slice %569 {offsets = [0, 0], sizes = [1, 224], strides = [1, 1]} : vector<1x256xf32> to vector<1x224xf32>
    %594 = tpu.concatenate %592, %593 in 1 : vector<1x32xf32>, vector<1x224xf32> -> vector<1x256xf32>
    %595 = vector.broadcast %591 : f32 to vector<1x256xf32>
    %596 = arith.mulf %595, %594 : vector<1x256xf32>
    %597 = arith.addf %583, %596 : vector<1x256xf32>
    %c19 = arith.constant 19 : index
    %598 = memref.load %arg2[%c19] : memref<98xf32, #tpu.memory_space<smem>>
    %cst_94 = arith.constant 0.000000e+00 : f32
    %599 = vector.broadcast %cst_94 : f32 to vector<1x16xf32>
    %600 = vector.extract_strided_slice %568 {offsets = [0, 0], sizes = [1, 240], strides = [1, 1]} : vector<1x256xf32> to vector<1x240xf32>
    %601 = tpu.concatenate %599, %600 in 1 : vector<1x16xf32>, vector<1x240xf32> -> vector<1x256xf32>
    %602 = vector.broadcast %598 : f32 to vector<1x256xf32>
    %603 = arith.mulf %602, %601 : vector<1x256xf32>
    %604 = arith.addf %590, %603 : vector<1x256xf32>
    %c68 = arith.constant 68 : index
    %605 = memref.load %arg2[%c68] : memref<98xf32, #tpu.memory_space<smem>>
    %cst_95 = arith.constant 0.000000e+00 : f32
    %606 = vector.broadcast %cst_95 : f32 to vector<1x16xf32>
    %607 = vector.extract_strided_slice %569 {offsets = [0, 0], sizes = [1, 240], strides = [1, 1]} : vector<1x256xf32> to vector<1x240xf32>
    %608 = tpu.concatenate %606, %607 in 1 : vector<1x16xf32>, vector<1x240xf32> -> vector<1x256xf32>
    %609 = vector.broadcast %605 : f32 to vector<1x256xf32>
    %610 = arith.mulf %609, %608 : vector<1x256xf32>
    %611 = arith.addf %597, %610 : vector<1x256xf32>
    %c26 = arith.constant 26 : index
    %612 = memref.load %arg2[%c26] : memref<98xf32, #tpu.memory_space<smem>>
    %613 = vector.broadcast %612 : f32 to vector<1x256xf32>
    %614 = arith.mulf %613, %568 : vector<1x256xf32>
    %615 = arith.addf %604, %614 : vector<1x256xf32>
    %c75 = arith.constant 75 : index
    %616 = memref.load %arg2[%c75] : memref<98xf32, #tpu.memory_space<smem>>
    %617 = vector.broadcast %616 : f32 to vector<1x256xf32>
    %618 = arith.mulf %617, %569 : vector<1x256xf32>
    %619 = arith.addf %611, %618 : vector<1x256xf32>
    %c33 = arith.constant 33 : index
    %620 = memref.load %arg2[%c33] : memref<98xf32, #tpu.memory_space<smem>>
    %621 = vector.extract_strided_slice %568 {offsets = [0, 16], sizes = [1, 240], strides = [1, 1]} : vector<1x256xf32> to vector<1x240xf32>
    %cst_96 = arith.constant 0.000000e+00 : f32
    %622 = vector.broadcast %cst_96 : f32 to vector<1x16xf32>
    %623 = tpu.concatenate %621, %622 in 1 : vector<1x240xf32>, vector<1x16xf32> -> vector<1x256xf32>
    %624 = vector.broadcast %620 : f32 to vector<1x256xf32>
    %625 = arith.mulf %624, %623 : vector<1x256xf32>
    %626 = arith.addf %615, %625 : vector<1x256xf32>
    %c82 = arith.constant 82 : index
    %627 = memref.load %arg2[%c82] : memref<98xf32, #tpu.memory_space<smem>>
    %628 = vector.extract_strided_slice %569 {offsets = [0, 16], sizes = [1, 240], strides = [1, 1]} : vector<1x256xf32> to vector<1x240xf32>
    %cst_97 = arith.constant 0.000000e+00 : f32
    %629 = vector.broadcast %cst_97 : f32 to vector<1x16xf32>
    %630 = tpu.concatenate %628, %629 in 1 : vector<1x240xf32>, vector<1x16xf32> -> vector<1x256xf32>
    %631 = vector.broadcast %627 : f32 to vector<1x256xf32>
    %632 = arith.mulf %631, %630 : vector<1x256xf32>
    %633 = arith.addf %619, %632 : vector<1x256xf32>
    %c40 = arith.constant 40 : index
    %634 = memref.load %arg2[%c40] : memref<98xf32, #tpu.memory_space<smem>>
    %635 = vector.extract_strided_slice %568 {offsets = [0, 32], sizes = [1, 224], strides = [1, 1]} : vector<1x256xf32> to vector<1x224xf32>
    %cst_98 = arith.constant 0.000000e+00 : f32
    %636 = vector.broadcast %cst_98 : f32 to vector<1x32xf32>
    %637 = tpu.concatenate %635, %636 in 1 : vector<1x224xf32>, vector<1x32xf32> -> vector<1x256xf32>
    %638 = vector.broadcast %634 : f32 to vector<1x256xf32>
    %639 = arith.mulf %638, %637 : vector<1x256xf32>
    %640 = arith.addf %626, %639 : vector<1x256xf32>
    %c89 = arith.constant 89 : index
    %641 = memref.load %arg2[%c89] : memref<98xf32, #tpu.memory_space<smem>>
    %642 = vector.extract_strided_slice %569 {offsets = [0, 32], sizes = [1, 224], strides = [1, 1]} : vector<1x256xf32> to vector<1x224xf32>
    %cst_99 = arith.constant 0.000000e+00 : f32
    %643 = vector.broadcast %cst_99 : f32 to vector<1x32xf32>
    %644 = tpu.concatenate %642, %643 in 1 : vector<1x224xf32>, vector<1x32xf32> -> vector<1x256xf32>
    %645 = vector.broadcast %641 : f32 to vector<1x256xf32>
    %646 = arith.mulf %645, %644 : vector<1x256xf32>
    %647 = arith.addf %633, %646 : vector<1x256xf32>
    %c47 = arith.constant 47 : index
    %648 = memref.load %arg2[%c47] : memref<98xf32, #tpu.memory_space<smem>>
    %649 = vector.extract_strided_slice %568 {offsets = [0, 48], sizes = [1, 208], strides = [1, 1]} : vector<1x256xf32> to vector<1x208xf32>
    %cst_100 = arith.constant 0.000000e+00 : f32
    %650 = vector.broadcast %cst_100 : f32 to vector<1x48xf32>
    %651 = tpu.concatenate %649, %650 in 1 : vector<1x208xf32>, vector<1x48xf32> -> vector<1x256xf32>
    %652 = vector.broadcast %648 : f32 to vector<1x256xf32>
    %653 = arith.mulf %652, %651 : vector<1x256xf32>
    %654 = arith.addf %640, %653 : vector<1x256xf32>
    %c96 = arith.constant 96 : index
    %655 = memref.load %arg2[%c96] : memref<98xf32, #tpu.memory_space<smem>>
    %656 = vector.extract_strided_slice %569 {offsets = [0, 48], sizes = [1, 208], strides = [1, 1]} : vector<1x256xf32> to vector<1x208xf32>
    %cst_101 = arith.constant 0.000000e+00 : f32
    %657 = vector.broadcast %cst_101 : f32 to vector<1x48xf32>
    %658 = tpu.concatenate %656, %657 in 1 : vector<1x208xf32>, vector<1x48xf32> -> vector<1x256xf32>
    %659 = vector.broadcast %655 : f32 to vector<1x256xf32>
    %660 = arith.mulf %659, %658 : vector<1x256xf32>
    %661 = arith.addf %647, %660 : vector<1x256xf32>
    %662 = vector.extract_strided_slice %5 {offsets = [0, 3], sizes = [1, 253], strides = [1, 1]} : vector<1x256xf32> to vector<1x253xf32>
    %cst_102 = arith.constant 0.000000e+00 : f32
    %663 = vector.broadcast %cst_102 : f32 to vector<1x3xf32>
    %664 = tpu.concatenate %662, %663 in 1 : vector<1x253xf32>, vector<1x3xf32> -> vector<1x256xf32>
    %665 = vector.extract_strided_slice %7 {offsets = [0, 3], sizes = [1, 253], strides = [1, 1]} : vector<1x256xf32> to vector<1x253xf32>
    %cst_103 = arith.constant 0.000000e+00 : f32
    %666 = vector.broadcast %cst_103 : f32 to vector<1x3xf32>
    %667 = tpu.concatenate %665, %666 in 1 : vector<1x253xf32>, vector<1x3xf32> -> vector<1x256xf32>
    %c3_i32 = arith.constant 3 : i32
    %668 = vector.broadcast %c3_i32 : i32 to vector<1x256xi32>
    %669 = arith.addi %12, %668 : vector<1x256xi32>
    %c0_i32_104 = arith.constant 0 : i32
    %670 = vector.broadcast %c0_i32_104 : i32 to vector<1x256xi32>
    %671 = arith.cmpi sge, %669, %670 : vector<1x256xi32>
    %c3_i32_105 = arith.constant 3 : i32
    %672 = vector.broadcast %c3_i32_105 : i32 to vector<1x256xi32>
    %673 = arith.addi %12, %672 : vector<1x256xi32>
    %c16_i32_106 = arith.constant 16 : i32
    %674 = vector.broadcast %c16_i32_106 : i32 to vector<1x256xi32>
    %675 = arith.cmpi slt, %673, %674 : vector<1x256xi32>
    %676 = arith.andi %671, %675 : vector<1x256xi1>
    %677 = arith.extui %676 : vector<1x256xi1> to vector<1x256xi32>
    %678 = arith.sitofp %677 : vector<1x256xi32> to vector<1x256xf32>
    %679 = arith.mulf %664, %678 : vector<1x256xf32>
    %680 = arith.mulf %667, %678 : vector<1x256xf32>
    %c6 = arith.constant 6 : index
    %681 = memref.load %arg2[%c6] : memref<98xf32, #tpu.memory_space<smem>>
    %cst_107 = arith.constant 0.000000e+00 : f32
    %682 = vector.broadcast %cst_107 : f32 to vector<1x48xf32>
    %683 = vector.extract_strided_slice %679 {offsets = [0, 0], sizes = [1, 208], strides = [1, 1]} : vector<1x256xf32> to vector<1x208xf32>
    %684 = tpu.concatenate %682, %683 in 1 : vector<1x48xf32>, vector<1x208xf32> -> vector<1x256xf32>
    %685 = vector.broadcast %681 : f32 to vector<1x256xf32>
    %686 = arith.mulf %685, %684 : vector<1x256xf32>
    %687 = arith.addf %654, %686 : vector<1x256xf32>
    %c55 = arith.constant 55 : index
    %688 = memref.load %arg2[%c55] : memref<98xf32, #tpu.memory_space<smem>>
    %cst_108 = arith.constant 0.000000e+00 : f32
    %689 = vector.broadcast %cst_108 : f32 to vector<1x48xf32>
    %690 = vector.extract_strided_slice %680 {offsets = [0, 0], sizes = [1, 208], strides = [1, 1]} : vector<1x256xf32> to vector<1x208xf32>
    %691 = tpu.concatenate %689, %690 in 1 : vector<1x48xf32>, vector<1x208xf32> -> vector<1x256xf32>
    %692 = vector.broadcast %688 : f32 to vector<1x256xf32>
    %693 = arith.mulf %692, %691 : vector<1x256xf32>
    %694 = arith.addf %661, %693 : vector<1x256xf32>
    %c13 = arith.constant 13 : index
    %695 = memref.load %arg2[%c13] : memref<98xf32, #tpu.memory_space<smem>>
    %cst_109 = arith.constant 0.000000e+00 : f32
    %696 = vector.broadcast %cst_109 : f32 to vector<1x32xf32>
    %697 = vector.extract_strided_slice %679 {offsets = [0, 0], sizes = [1, 224], strides = [1, 1]} : vector<1x256xf32> to vector<1x224xf32>
    %698 = tpu.concatenate %696, %697 in 1 : vector<1x32xf32>, vector<1x224xf32> -> vector<1x256xf32>
    %699 = vector.broadcast %695 : f32 to vector<1x256xf32>
    %700 = arith.mulf %699, %698 : vector<1x256xf32>
    %701 = arith.addf %687, %700 : vector<1x256xf32>
    %c62 = arith.constant 62 : index
    %702 = memref.load %arg2[%c62] : memref<98xf32, #tpu.memory_space<smem>>
    %cst_110 = arith.constant 0.000000e+00 : f32
    %703 = vector.broadcast %cst_110 : f32 to vector<1x32xf32>
    %704 = vector.extract_strided_slice %680 {offsets = [0, 0], sizes = [1, 224], strides = [1, 1]} : vector<1x256xf32> to vector<1x224xf32>
    %705 = tpu.concatenate %703, %704 in 1 : vector<1x32xf32>, vector<1x224xf32> -> vector<1x256xf32>
    %706 = vector.broadcast %702 : f32 to vector<1x256xf32>
    %707 = arith.mulf %706, %705 : vector<1x256xf32>
    %708 = arith.addf %694, %707 : vector<1x256xf32>
    %c20 = arith.constant 20 : index
    %709 = memref.load %arg2[%c20] : memref<98xf32, #tpu.memory_space<smem>>
    %cst_111 = arith.constant 0.000000e+00 : f32
    %710 = vector.broadcast %cst_111 : f32 to vector<1x16xf32>
    %711 = vector.extract_strided_slice %679 {offsets = [0, 0], sizes = [1, 240], strides = [1, 1]} : vector<1x256xf32> to vector<1x240xf32>
    %712 = tpu.concatenate %710, %711 in 1 : vector<1x16xf32>, vector<1x240xf32> -> vector<1x256xf32>
    %713 = vector.broadcast %709 : f32 to vector<1x256xf32>
    %714 = arith.mulf %713, %712 : vector<1x256xf32>
    %715 = arith.addf %701, %714 : vector<1x256xf32>
    %c69 = arith.constant 69 : index
    %716 = memref.load %arg2[%c69] : memref<98xf32, #tpu.memory_space<smem>>
    %cst_112 = arith.constant 0.000000e+00 : f32
    %717 = vector.broadcast %cst_112 : f32 to vector<1x16xf32>
    %718 = vector.extract_strided_slice %680 {offsets = [0, 0], sizes = [1, 240], strides = [1, 1]} : vector<1x256xf32> to vector<1x240xf32>
    %719 = tpu.concatenate %717, %718 in 1 : vector<1x16xf32>, vector<1x240xf32> -> vector<1x256xf32>
    %720 = vector.broadcast %716 : f32 to vector<1x256xf32>
    %721 = arith.mulf %720, %719 : vector<1x256xf32>
    %722 = arith.addf %708, %721 : vector<1x256xf32>
    %c27 = arith.constant 27 : index
    %723 = memref.load %arg2[%c27] : memref<98xf32, #tpu.memory_space<smem>>
    %724 = vector.broadcast %723 : f32 to vector<1x256xf32>
    %725 = arith.mulf %724, %679 : vector<1x256xf32>
    %726 = arith.addf %715, %725 : vector<1x256xf32>
    %c76 = arith.constant 76 : index
    %727 = memref.load %arg2[%c76] : memref<98xf32, #tpu.memory_space<smem>>
    %728 = vector.broadcast %727 : f32 to vector<1x256xf32>
    %729 = arith.mulf %728, %680 : vector<1x256xf32>
    %730 = arith.addf %722, %729 : vector<1x256xf32>
    %c34 = arith.constant 34 : index
    %731 = memref.load %arg2[%c34] : memref<98xf32, #tpu.memory_space<smem>>
    %732 = vector.extract_strided_slice %679 {offsets = [0, 16], sizes = [1, 240], strides = [1, 1]} : vector<1x256xf32> to vector<1x240xf32>
    %cst_113 = arith.constant 0.000000e+00 : f32
    %733 = vector.broadcast %cst_113 : f32 to vector<1x16xf32>
    %734 = tpu.concatenate %732, %733 in 1 : vector<1x240xf32>, vector<1x16xf32> -> vector<1x256xf32>
    %735 = vector.broadcast %731 : f32 to vector<1x256xf32>
    %736 = arith.mulf %735, %734 : vector<1x256xf32>
    %737 = arith.addf %726, %736 : vector<1x256xf32>
    %c83 = arith.constant 83 : index
    %738 = memref.load %arg2[%c83] : memref<98xf32, #tpu.memory_space<smem>>
    %739 = vector.extract_strided_slice %680 {offsets = [0, 16], sizes = [1, 240], strides = [1, 1]} : vector<1x256xf32> to vector<1x240xf32>
    %cst_114 = arith.constant 0.000000e+00 : f32
    %740 = vector.broadcast %cst_114 : f32 to vector<1x16xf32>
    %741 = tpu.concatenate %739, %740 in 1 : vector<1x240xf32>, vector<1x16xf32> -> vector<1x256xf32>
    %742 = vector.broadcast %738 : f32 to vector<1x256xf32>
    %743 = arith.mulf %742, %741 : vector<1x256xf32>
    %744 = arith.addf %730, %743 : vector<1x256xf32>
    %c41 = arith.constant 41 : index
    %745 = memref.load %arg2[%c41] : memref<98xf32, #tpu.memory_space<smem>>
    %746 = vector.extract_strided_slice %679 {offsets = [0, 32], sizes = [1, 224], strides = [1, 1]} : vector<1x256xf32> to vector<1x224xf32>
    %cst_115 = arith.constant 0.000000e+00 : f32
    %747 = vector.broadcast %cst_115 : f32 to vector<1x32xf32>
    %748 = tpu.concatenate %746, %747 in 1 : vector<1x224xf32>, vector<1x32xf32> -> vector<1x256xf32>
    %749 = vector.broadcast %745 : f32 to vector<1x256xf32>
    %750 = arith.mulf %749, %748 : vector<1x256xf32>
    %751 = arith.addf %737, %750 : vector<1x256xf32>
    %c90 = arith.constant 90 : index
    %752 = memref.load %arg2[%c90] : memref<98xf32, #tpu.memory_space<smem>>
    %753 = vector.extract_strided_slice %680 {offsets = [0, 32], sizes = [1, 224], strides = [1, 1]} : vector<1x256xf32> to vector<1x224xf32>
    %cst_116 = arith.constant 0.000000e+00 : f32
    %754 = vector.broadcast %cst_116 : f32 to vector<1x32xf32>
    %755 = tpu.concatenate %753, %754 in 1 : vector<1x224xf32>, vector<1x32xf32> -> vector<1x256xf32>
    %756 = vector.broadcast %752 : f32 to vector<1x256xf32>
    %757 = arith.mulf %756, %755 : vector<1x256xf32>
    %758 = arith.addf %744, %757 : vector<1x256xf32>
    %c48 = arith.constant 48 : index
    %759 = memref.load %arg2[%c48] : memref<98xf32, #tpu.memory_space<smem>>
    %760 = vector.extract_strided_slice %679 {offsets = [0, 48], sizes = [1, 208], strides = [1, 1]} : vector<1x256xf32> to vector<1x208xf32>
    %cst_117 = arith.constant 0.000000e+00 : f32
    %761 = vector.broadcast %cst_117 : f32 to vector<1x48xf32>
    %762 = tpu.concatenate %760, %761 in 1 : vector<1x208xf32>, vector<1x48xf32> -> vector<1x256xf32>
    %763 = vector.broadcast %759 : f32 to vector<1x256xf32>
    %764 = arith.mulf %763, %762 : vector<1x256xf32>
    %765 = arith.addf %751, %764 : vector<1x256xf32>
    %c97 = arith.constant 97 : index
    %766 = memref.load %arg2[%c97] : memref<98xf32, #tpu.memory_space<smem>>
    %767 = vector.extract_strided_slice %680 {offsets = [0, 48], sizes = [1, 208], strides = [1, 1]} : vector<1x256xf32> to vector<1x208xf32>
    %cst_118 = arith.constant 0.000000e+00 : f32
    %768 = vector.broadcast %cst_118 : f32 to vector<1x48xf32>
    %769 = tpu.concatenate %767, %768 in 1 : vector<1x208xf32>, vector<1x48xf32> -> vector<1x256xf32>
    %770 = vector.broadcast %766 : f32 to vector<1x256xf32>
    %771 = arith.mulf %770, %769 : vector<1x256xf32>
    %772 = arith.addf %758, %771 : vector<1x256xf32>
    %773 = arith.addf %765, %772 : vector<1x256xf32>
    %c0_119 = arith.constant 0 : index
    %774 = memref.load %arg3[%c0_119] : memref<1xf32, #tpu.memory_space<smem>>
    %775 = vector.broadcast %774 : f32 to vector<1x256xf32>
    %776 = arith.addf %773, %775 : vector<1x256xf32>
    %777 = arith.negf %776 : vector<1x256xf32>
    %778 = math.exp %777 : vector<1x256xf32>
    %cst_120 = arith.constant 1.000000e+00 : f32
    %779 = vector.broadcast %cst_120 : f32 to vector<1x256xf32>
    %780 = arith.addf %779, %778 : vector<1x256xf32>
    %781 = arith.divf %779, %780 : vector<1x256xf32>
    %c0_121 = arith.constant 0 : index
    %c0_122 = arith.constant 0 : index
    %c0_123 = arith.constant 0 : index
    %782 = vector.load %arg1[%c0_121, %c0_122, %c0_123] : memref<1x4x256xf32, #tpu.memory_space<vmem>>, vector<1x4x256xf32>
    %783 = vector.shape_cast %782 : vector<1x4x256xf32> to vector<4x256xf32>
    %784 = vector.broadcast %781 : vector<1x256xf32> to vector<4x256xf32>
    %785 = arith.mulf %783, %784 : vector<4x256xf32>
    %c0_124 = arith.constant 0 : index
    %c0_125 = arith.constant 0 : index
    %c0_126 = arith.constant 0 : index
    %786 = vector.load %arg4[%c0_124, %c0_125, %c0_126] : memref<1x4x256xf32, #tpu.memory_space<vmem>>, vector<1x4x256xf32>
    %787 = vector.shape_cast %786 : vector<1x4x256xf32> to vector<4x256xf32>
    %788 = vector.shape_cast %785 : vector<4x256xf32> to vector<1x4x256xf32>
    tpu.vector_store %arg4[%c0_124, %c0_125, %c0_126], %788 {strides = array<i32>} : memref<1x4x256xf32, #tpu.memory_space<vmem>>, vector<1x4x256xf32>,
    return
  }
  func.func @transform_0(%arg0: i32) -> (i32, i32, i32) {
    %c0_i32 = arith.constant 0 : i32
    %c0_i32_0 = arith.constant 0 : i32
    %c0_i32_1 = arith.constant 0 : i32
    return %arg0, %c0_i32, %c0_i32_0 : i32, i32, i32
  }
  func.func @transform_1(%arg0: i32) -> i32 {
    %c0_i32 = arith.constant 0 : i32
    %c0_i32_0 = arith.constant 0 : i32
    return %c0_i32 : i32
  }
  func.func @transform_2(%arg0: i32) -> i32 {
    %c0_i32 = arith.constant 0 : i32
    %c0_i32_0 = arith.constant 0 : i32
    return %c0_i32 : i32
  }
  func.func @transform_3(%arg0: i32) -> (i32, i32, i32) {
    %c0_i32 = arith.constant 0 : i32
    %c0_i32_0 = arith.constant 0 : i32
    %c0_i32_1 = arith.constant 0 : i32
    return %arg0, %c0_i32, %c0_i32_0 : i32, i32, i32
  }
}

</mosaic_0001>

<llo_original>
// kernel: tpu_custom_call.1
$region0: #{tpu_custom_call.1}
  #allocation0 [shape = 'u32[]', space=smem, size = 0x4, offset = 0x4, fixed_abs, tag = 'smem constant byte address 0x4 - core index']
  #allocation1 [shape = 'u32[144,128]{1,0:T(1,128)}', space=vmem, size = 0x12000, scoped, tag = 'internal scratch']
  #allocation2 [shape = 'f32[1]{0:T(128)S(6)}', space=smem, size = 0x200, scoped, tag = 'scoped memory for tpu_custom_call.1']
  %s0 = inlined_call_operand.hbm [shape: f32[2,4,256], index: 0, kind: input, shape index: {}]
  %s1 = inlined_call_operand.vmem [shape: f32[98], index: 1, kind: input, shape index: {}]
  %s2 = inlined_call_operand.<no memory space> [shape: f32[1], index: 2, kind: input, shape index: {}]
  %s3 = inlined_call_operand.hbm [shape: f32[2,4,256], index: 3, kind: output, shape index: {}]
  %s4 = sld [smem:[#allocation0]]
  $region53: #{tpu_custom_call.1} parent=0
    _
  %s6 = ssub.s32 1, %s4
  %s7 = scalar_select 0, %s6, %s4
  %8 = sst [smem:[#allocation2]] %s2
  $region1: #{tpu_custom_call.1} parent=0
    #allocation3 [shape = 'u8[8192]{0}', space=vmem, size = 0x2000, scoped, tag = 'input window, operand 0']
    #allocation4 [shape = 's32[2]{0}', space=sflag, size = 0x8, scoped, tag = 'scoped memory for tpu_custom_call.1']
    #allocation5 [shape = 's32[2]{0}', space=sflag, size = 0x8, scoped, tag = 'scoped memory for tpu_custom_call.1']
    #allocation6 [shape = 's32[2]{0}', space=sflag, size = 0x8, scoped, tag = 'scoped memory for tpu_custom_call.1']
    #allocation7 [shape = 'u8[512]{0}', space=smem, size = 0x200, scoped, tag = 'input window, operand 1, single buffered']
    #allocation8 [shape = 'u8[8192]{0}', space=vmem, size = 0x2000, scoped, tag = 'output window, operand 0']
    %9 = vsyncpa [#allocation4], 0
    %s10 = scalar_lea.sflag [#allocation4], 1
    %11 = vsyncpa %s10, 0
    %12 = vsyncpa [#allocation6], 0
    %13 = vsyncpa [#allocation5], 0
    %s14 = scalar_lea.sflag [#allocation5], 1
    %15 = vsyncpa %s14, 0
    loop: start=0, step=1, limit=4
    $region2: #{tpu_custom_call.1} parent=1 // loop_pre_header
      _
    $region3: #{tpu_custom_call.1} parent=1 // loop_header
      %s17 = sphi 0, %s21
      %p18 = scmp.ge.s32.totalorder %s17, 4
      %s27 = sphi 0, %s29
      %s30 = sphi 0, %s27
      %s31 = sphi 0, %s30
      %s47 = sphi 0, %s31
      %s51 = sphi 0, %s51
      %s53 = sphi 0, %s51
      %s54 = sphi 0, %s53
      %s68 = sphi 0, %s54
      %s72 = sphi 0, %s72
      %s74 = sphi 0, %s72
      %s75 = sphi 0, %s74
      %s89 = sphi 0, %s75
      %s95 = sphi 0, %s97
      %s98 = sphi 0, %s95
      %s99 = sphi 0, %s98
      %s115 = sphi 0, %s99
    $region4: #{tpu_custom_call.1} parent=1 // loop_header_branch
      %20 = sbr.rel (%p18) target = $region8
    $region5: #{tpu_custom_call.1} parent=1 // loop_body
      %s22 = ssub.s32 %s17, 1
      %s23 = ssub.s32 %s17, 2
      %s24 = sadd.s32 %s17, 1
      %s25 = ssub.s32 %s17, %s24
      %p26 = scmp.eq.s32.totalorder %s25, 0
      %s28 = sadd.s32 %s27, 1
      %s29 = scalar_select %p26, %s27, %s28
      %p32 = pneg %p26
      %p33 = scmp.eq.s32.totalorder %s17, 1
      %p34 = por %p32, %p33
      %p35 = scmp.ne.s32.totalorder %s27, %s30
      %p36 = scmp.eq.s32.totalorder %s17, 0
      %p37 = por %p35, %p36
      %p38 = scmp.ne.s32.totalorder %s27, %s30
      %p39 = scmp.eq.s32.totalorder %s22, 1
      %p40 = por %p38, %p39
      %p41 = scmp.ne.s32.totalorder %s30, %s31
      %p42 = scmp.eq.s32.totalorder %s22, 0
      %p43 = por %p41, %p42
      %p44 = scmp.ne.s32.totalorder %s30, %s31
      %p45 = scmp.eq.s32.totalorder %s23, 1
      %p46 = por %p44, %p45
      %p48 = scmp.ne.s32.totalorder %s31, %s47
      %p49 = scmp.eq.s32.totalorder %s23, 0
      %p50 = por %p48, %p49
      %s52 = sadd.s32 %s51, 1
      %p55 = scmp.eq.s32.totalorder %s17, 1
      %p56 = scmp.ne.s32.totalorder %s51, %s53
      %p57 = scmp.eq.s32.totalorder %s17, 0
      %p58 = por %p56, %p57
      %p59 = scmp.ne.s32.totalorder %s51, %s53
      %p60 = scmp.eq.s32.totalorder %s22, 1
      %p61 = por %p59, %p60
      %p62 = scmp.ne.s32.totalorder %s53, %s54
      %p63 = scmp.eq.s32.totalorder %s22, 0
      %p64 = por %p62, %p63
      %p65 = scmp.ne.s32.totalorder %s53, %s54
      %p66 = scmp.eq.s32.totalorder %s23, 1
      %p67 = por %p65, %p66
      %p69 = scmp.ne.s32.totalorder %s54, %s68
      %p70 = scmp.eq.s32.totalorder %s23, 0
      %p71 = por %p69, %p70
      %s73 = sadd.s32 %s72, 1
      %p76 = scmp.eq.s32.totalorder %s17, 1
      %p77 = scmp.ne.s32.totalorder %s72, %s74
      %p78 = scmp.eq.s32.totalorder %s17, 0
      %p79 = por %p77, %p78
      %p80 = scmp.ne.s32.totalorder %s72, %s74
      %p81 = scmp.eq.s32.totalorder %s22, 1
      %p82 = por %p80, %p81
      %p83 = scmp.ne.s32.totalorder %s74, %s75
      %p84 = scmp.eq.s32.totalorder %s22, 0
      %p85 = por %p83, %p84
      %p86 = scmp.ne.s32.totalorder %s74, %s75
      %p87 = scmp.eq.s32.totalorder %s23, 1
      %p88 = por %p86, %p87
      %p90 = scmp.ne.s32.totalorder %s75, %s89
      %p91 = scmp.eq.s32.totalorder %s23, 0
      %p92 = por %p90, %p91
      %s93 = ssub.s32 %s17, %s24
      %p94 = scmp.eq.s32.totalorder %s93, 0
      %s96 = sadd.s32 %s95, 1
      %s97 = scalar_select %p94, %s95, %s96
      %p100 = pneg %p94
      %p101 = scmp.eq.s32.totalorder %s17, 1
      %p102 = por %p100, %p101
      %p103 = scmp.ne.s32.totalorder %s95, %s98
      %p104 = scmp.eq.s32.totalorder %s17, 0
      %p105 = por %p103, %p104
      %p106 = scmp.ne.s32.totalorder %s95, %s98
      %p107 = scmp.eq.s32.totalorder %s22, 1
      %p108 = por %p106, %p107
      %p109 = scmp.ne.s32.totalorder %s98, %s99
      %p110 = scmp.eq.s32.totalorder %s22, 0
      %p111 = por %p109, %p110
      %p112 = scmp.ne.s32.totalorder %s98, %s99
      %p113 = scmp.eq.s32.totalorder %s23, 1
      %p114 = por %p112, %p113
      %p116 = scmp.ne.s32.totalorder %s99, %s115
      %p117 = scmp.eq.s32.totalorder %s23, 0
      %p118 = por %p116, %p117
      %p119 = scmp.le.s32.totalorder 1, %s17
      %p120 = scmp.lt.s32.totalorder %s17, 3
      %p121 = pnand %p119, %p120
      %p122 = pneg %p121
      // Predicated region
      $region9: #{tpu_custom_call.1} parent=5 // pred_check
        _
      $region10: #{tpu_custom_call.1} parent=5 // pred_check_branch
        %124 = sbr.rel (%p121) target = $region12
      $region11: #{tpu_custom_call.1} parent=5 // pred_region
        %s125 = ssub.s32 %s17, 1
        // Predicated region
        $region13: #{tpu_custom_call.1} parent=11 // pred_check
          %p126 = pneg %p64
        $region14: #{tpu_custom_call.1} parent=11 // pred_check_branch
          %128 = sbr.rel (%p126) target = $region16
        $region15: #{tpu_custom_call.1} parent=11 // pred_region
          %s130 = ssub.s32 16, 16
          %131 = vsyncadd [#allocation6], %s130
          %s133 = sshll.u32 %s1, 4
          %s134 = int_to_ptr.vmem [resolvable:$true] %s133
          %136 = dma.vmem_to_smem %s134, 16, [#allocation7], [#allocation6]
        $region16: #{tpu_custom_call.1} parent=11 // pred_fallthru
          _
        // Predicated region
        $region17: #{tpu_custom_call.1} parent=11 // pred_check
          %p137 = pneg %p85
        $region18: #{tpu_custom_call.1} parent=11 // pred_check_branch
          %139 = sbr.rel (%p137) target = $region20
        $region19: #{tpu_custom_call.1} parent=11 // pred_region
          _
        $region20: #{tpu_custom_call.1} parent=11 // pred_fallthru
          _
      $region12: #{tpu_custom_call.1} parent=5 // pred_fallthru
        _
      %p140 = scmp.lt.s32.totalorder %s17, 2
      // Predicated region
      $region21: #{tpu_custom_call.1} parent=5 // pred_check
        %p141 = pneg %p140
      $region22: #{tpu_custom_call.1} parent=5 // pred_check_branch
        %143 = sbr.rel (%p141) target = $region24
      $region23: #{tpu_custom_call.1} parent=5 // pred_region
        // Predicated region
        $region25: #{tpu_custom_call.1} parent=23 // pred_check
          %p144 = pneg %p37
        $region26: #{tpu_custom_call.1} parent=23 // pred_check_branch
          %146 = sbr.rel (%p144) target = $region28
        $region27: #{tpu_custom_call.1} parent=23 // pred_region
          %s147 = sand.u32 %s27, 1
          %s148 = scalar_lea.sflag [#allocation4], %s147
          %s149 = sand.u32 %s27, 1
          %s150 = smul.addr %s149, 8
          %s151 = scalar_lea.vmem [#allocation3], %s150
          %s153 = ssub.s32 128, 128
          %154 = vsyncadd %s148, %s153
          %s155 = smul.addr %s17, 2
          %s156 = smul.addr %s155, 64
          %s157 = scalar_lea.hbm %s0, %s156
          %s159 = sshll.u32 %s151, 4
          %s160 = int_to_ptr.vmem [resolvable:$true] %s159
          %162 = dma.hbm_to_vmem [thread:$0]  %s157, 128, %s160, %s148
        $region28: #{tpu_custom_call.1} parent=23 // pred_fallthru
          _
      $region24: #{tpu_custom_call.1} parent=5 // pred_fallthru
        _
      %p163 = scmp.le.s32.totalorder 1, %s17
      %p164 = scmp.lt.s32.totalorder %s17, 3
      %p165 = pnand %p163, %p164
      %p166 = pneg %p165
      // Predicated region
      $region29: #{tpu_custom_call.1} parent=5 // pred_check
        _
      $region30: #{tpu_custom_call.1} parent=5 // pred_check_branch
        %168 = sbr.rel (%p165) target = $region32
      $region31: #{tpu_custom_call.1} parent=5 // pred_region
        %s169 = ssub.s32 %s17, 1
        %s170 = sand.u32 %s30, 1
        %s171 = scalar_lea.sflag [#allocation4], %s170
        %s172 = sand.u32 %s30, 1
        %s173 = smul.addr %s172, 8
        %s174 = scalar_lea.vmem [#allocation3], %s173
        // Predicated region
        $region33: #{tpu_custom_call.1} parent=31 // pred_check
          %p175 = pneg %p43
        $region34: #{tpu_custom_call.1} parent=31 // pred_check_branch
          %177 = sbr.rel (%p175) target = $region36
        $region35: #{tpu_custom_call.1} parent=31 // pred_region
          %178 = dma.done %s171, 128
        $region36: #{tpu_custom_call.1} parent=31 // pred_fallthru
          _
        // Predicated region
        $region37: #{tpu_custom_call.1} parent=31 // pred_check
          %p179 = pneg %p64
        $region38: #{tpu_custom_call.1} parent=31 // pred_check_branch
          %181 = sbr.rel (%p179) target = $region40
        $region39: #{tpu_custom_call.1} parent=31 // pred_region
          %182 = dma.done [#allocation6], 16
        $region40: #{tpu_custom_call.1} parent=31 // pred_fallthru
          _
        %183 = sfence
        %s184 = sand.u32 %s30, 1
        %s185 = scalar_lea.sflag [#allocation4], %s184
        %s186 = sand.u32 %s30, 1
        %s187 = smul.addr %s186, 8
        %s188 = scalar_lea.vmem [#allocation3], %s187
        %p189 = pneg %p43
        %p190 = pneg %p40
        %p191 = pneg %p64
        %p192 = pneg %p61
        %p193 = pneg %p85
        %p194 = pneg %p82
        %p195 = pneg %p111
        %p196 = pneg %p108
        %s197 = sand.u32 %s98, 1
        %s198 = scalar_lea.sflag [#allocation5], %s197
        %s199 = sand.u32 %s98, 1
        %s200 = smul.addr %s199, 8
        %s201 = scalar_lea.vmem [#allocation8], %s200
        %v202 = vld [vmem:[%s174] sm:$0xff]
        %v204 = vcombine.high %v202, %v202
        %vm206 = vcmask 1043456
        %v207 = vsel %vm206, %v202, 0.0
        %v208 = vrot.slane %v207, 4
        %v209 = vadd.f32 %v207, %v208
        %v210 = vrot.slane %v209, 2
        %v211 = vadd.f32 %v209, %v210
        %v212 = vrot.slane %v211, 1
        %v213 = vadd.f32 %v211, %v212
        %v214 = vsel %vm206, %v204, 0.0
        %v215 = vrot.slane %v214, 4
        %v216 = vadd.f32 %v214, %v215
        %v217 = vrot.slane %v216, 2
        %v218 = vadd.f32 %v216, %v217
        %v219 = vrot.slane %v218, 1
        %v220 = vadd.f32 %v218, %v219
        %v221 = vmul.f32 %v213, 0.25
        %v222 = vmul.f32 %v220, 0.25
        %v223 = vsel %vm206, %v202, -inf
        %v224 = vrot.slane %v223, 4
        %v225 = vmax.f32 %v223, %v224
        %v226 = vrot.slane %v225, 2
        %v227 = vmax.f32 %v225, %v226
        %v228 = vrot.slane %v227, 1
        %v229 = vmax.f32 %v227, %v228
        %v230 = vsel %vm206, %v204, -inf
        %v231 = vrot.slane %v230, 4
        %v232 = vmax.f32 %v230, %v231
        %v233 = vrot.slane %v232, 2
        %v234 = vmax.f32 %v232, %v233
        %v235 = vrot.slane %v234, 1
        %v236 = vmax.f32 %v234, %v235
        %v237 = vlaneseq
        %v238 = vand.u32 %v237, 127
        %239 = vrot.lane.b32.xlu0 %v238, 16
        %v240 = vpop.permute.xlu0 %239
        %vm241 = vcmask 130048
        %v242 = vsel %vm241, %v238, %v240
        %243 = vrot.lane.b32.xlu0 %v242, 32
        %v244 = vpop.permute.xlu0 %243
        %vm245 = vcmask 261120
        %v246 = vsel %vm245, %v242, %v244
        %247 = vrot.lane.b32.xlu0 %v246, 64
        %v248 = vpop.permute.xlu0 %247
        %vm249 = vcmask 523264
        %v250 = vsel %vm249, %v246, %v248
        %253 = vrot.lane.b32.xlu0 %v221, 3
        %v254 = vpop.permute.xlu0 %253
        %255 = vrot.lane.b32.xlu0 %v222, 3
        %v256 = vpop.permute.xlu0 %255
        %vm257 = vcmask 23552
        %v258 = vsel %vm257, %v254, %v256
        %v261 = vsel %vm257, 0.0, %v254
        %264 = vrot.lane.b32.xlu0 %v229, 3
        %v265 = vpop.permute.xlu0 %264
        %266 = vrot.lane.b32.xlu0 %v236, 3
        %v267 = vpop.permute.xlu0 %266
        %v268 = vsel %vm257, %v265, %v267
        %v271 = vsel %vm257, 0.0, %v265
        %v272 = vadd.s32 %v250, 4294967293
        %vm273 = vcmp.ge.s32.totalorder %v272, 0
        %vm274 = vcmp.lt.s32.totalorder %v272, 16
        %vm275 = vmand %vm273, %vm274
        %v276 = vsel %vm275, 1, 0
        %v277 = vcvt.s32.f32 %v276
        %v278 = vmul.f32 %v261, %v277
        %v279 = vmul.f32 %v258, %v277
        %v280 = vmul.f32 %v271, %v277
        %v281 = vmul.f32 %v268, %v277
        %s282 = sld [smem:[#allocation7]]
        %285 = vrot.lane.b32.xlu0 %v278, 48
        %v286 = vpop.permute.xlu0 %285
        %287 = vrot.lane.b32.xlu0 %v279, 48
        %v288 = vpop.permute.xlu0 %287
        %vm289 = vcmask 392192
        %v290 = vsel %vm289, %v286, %v288
        %v293 = vsel %vm289, 0.0, %v286
        %v294 = vstv %s282
        %v295 = vmul.f32 %v294, %v293
        %v296 = vmul.f32 %v294, %v290
        %v297 = vadd.f32 %v295, 0.0
        %v298 = vadd.f32 %v296, 0.0
        %s299 = sld [smem:[#allocation7 + $0x31]]
        %302 = vrot.lane.b32.xlu0 %v280, 48
        %v303 = vpop.permute.xlu0 %302
        %304 = vrot.lane.b32.xlu0 %v281, 48
        %v305 = vpop.permute.xlu0 %304
        %v306 = vsel %vm289, %v303, %v305
        %v309 = vsel %vm289, 0.0, %v303
        %v310 = vstv %s299
        %v311 = vmul.f32 %v310, %v309
        %v312 = vmul.f32 %v310, %v306
        %v313 = vadd.f32 %v311, 0.0
        %v314 = vadd.f32 %v312, 0.0
        %s315 = sld [smem:[#allocation7 + $0x7]]
        %316 = vrot.lane.b32.xlu0 %v278, 32
        %v317 = vpop.permute.xlu0 %316
        %318 = vrot.lane.b32.xlu0 %v279, 32
        %v319 = vpop.permute.xlu0 %318
        %v320 = vsel %vm245, %v317, %v319
        %v323 = vsel %vm245, 0.0, %v317
        %v324 = vstv %s315
        %v325 = vmul.f32 %v324, %v323
        %v326 = vmul.f32 %v324, %v320
        %v327 = vadd.f32 %v297, %v325
        %v328 = vadd.f32 %v298, %v326
        %s329 = sld [smem:[#allocation7 + $0x38]]
        %330 = vrot.lane.b32.xlu0 %v280, 32
        %v331 = vpop.permute.xlu0 %330
        %332 = vrot.lane.b32.xlu0 %v281, 32
        %v333 = vpop.permute.xlu0 %332
        %v334 = vsel %vm245, %v331, %v333
        %v337 = vsel %vm245, 0.0, %v331
        %v338 = vstv %s329
        %v339 = vmul.f32 %v338, %v337
        %v340 = vmul.f32 %v338, %v334
        %v341 = vadd.f32 %v313, %v339
        %v342 = vadd.f32 %v314, %v340
        %s343 = sld [smem:[#allocation7 + $0xe]]
        %344 = vrot.lane.b32.xlu0 %v278, 16
        %v345 = vpop.permute.xlu0 %344
        %346 = vrot.lane.b32.xlu0 %v279, 16
        %v347 = vpop.permute.xlu0 %346
        %v348 = vsel %vm241, %v345, %v347
        %v351 = vsel %vm241, 0.0, %v345
        %v352 = vstv %s343
        %v353 = vmul.f32 %v352, %v351
        %v354 = vmul.f32 %v352, %v348
        %v355 = vadd.f32 %v327, %v353
        %v356 = vadd.f32 %v328, %v354
        %s357 = sld [smem:[#allocation7 + $0x3f]]
        %358 = vrot.lane.b32.xlu0 %v280, 16
        %v359 = vpop.permute.xlu0 %358
        %360 = vrot.lane.b32.xlu0 %v281, 16
        %v361 = vpop.permute.xlu0 %360
        %v362 = vsel %vm241, %v359, %v361
        %v365 = vsel %vm241, 0.0, %v359
        %v366 = vstv %s357
        %v367 = vmul.f32 %v366, %v365
        %v368 = vmul.f32 %v366, %v362
        %v369 = vadd.f32 %v341, %v367
        %v370 = vadd.f32 %v342, %v368
        %s371 = sld [smem:[#allocation7 + $0x15]]
        %v372 = vstv %s371
        %v373 = vmul.f32 %v372, %v278
        %v374 = vmul.f32 %v372, %v279
        %v375 = vadd.f32 %v355, %v373
        %v376 = vadd.f32 %v356, %v374
        %s377 = sld [smem:[#allocation7 + $0x46]]
        %v378 = vstv %s377
        %v379 = vmul.f32 %v378, %v280
        %v380 = vmul.f32 %v378, %v281
        %v381 = vadd.f32 %v369, %v379
        %v382 = vadd.f32 %v370, %v380
        %s383 = sld [smem:[#allocation7 + $0x1c]]
        %384 = vrot.lane.b32.xlu0 %v278, 112
        %v385 = vpop.permute.xlu0 %384
        %386 = vrot.lane.b32.xlu0 %v279, 112
        %v387 = vpop.permute.xlu0 %386
        %vm388 = vcmask 916480
        %v389 = vsel %vm388, %v385, %v387
        %v392 = vsel %vm388, %v387, 0.0
        %v393 = vstv %s383
        %v394 = vmul.f32 %v393, %v389
        %v395 = vmul.f32 %v393, %v392
        %v396 = vadd.f32 %v375, %v394
        %v397 = vadd.f32 %v376, %v395
        %s398 = sld [smem:[#allocation7 + $0x4d]]
        %399 = vrot.lane.b32.xlu0 %v280, 112
        %v400 = vpop.permute.xlu0 %399
        %401 = vrot.lane.b32.xlu0 %v281, 112
        %v402 = vpop.permute.xlu0 %401
        %v403 = vsel %vm388, %v400, %v402
        %v406 = vsel %vm388, %v402, 0.0
        %v407 = vstv %s398
        %v408 = vmul.f32 %v407, %v403
        %v409 = vmul.f32 %v407, %v406
        %v410 = vadd.f32 %v381, %v408
        %v411 = vadd.f32 %v382, %v409
        %s412 = sld [smem:[#allocation7 + $0x23]]
        %413 = vrot.lane.b32.xlu0 %v278, 96
        %v414 = vpop.permute.xlu0 %413
        %415 = vrot.lane.b32.xlu0 %v279, 96
        %v416 = vpop.permute.xlu0 %415
        %vm417 = vcmask 785408
        %v418 = vsel %vm417, %v414, %v416
        %v421 = vsel %vm417, %v416, 0.0
        %v422 = vstv %s412
        %v423 = vmul.f32 %v422, %v418
        %v424 = vmul.f32 %v422, %v421
        %v425 = vadd.f32 %v396, %v423
        %v426 = vadd.f32 %v397, %v424
        %s427 = sld [smem:[#allocation7 + $0x54]]
        %428 = vrot.lane.b32.xlu0 %v280, 96
        %v429 = vpop.permute.xlu0 %428
        %430 = vrot.lane.b32.xlu0 %v281, 96
        %v431 = vpop.permute.xlu0 %430
        %v432 = vsel %vm417, %v429, %v431
        %v435 = vsel %vm417, %v431, 0.0
        %v436 = vstv %s427
        %v437 = vmul.f32 %v436, %v432
        %v438 = vmul.f32 %v436, %v435
        %v439 = vadd.f32 %v410, %v437
        %v440 = vadd.f32 %v411, %v438
        %s441 = sld [smem:[#allocation7 + $0x2a]]
        %442 = vrot.lane.b32.xlu0 %v278, 80
        %v443 = vpop.permute.xlu0 %442
        %444 = vrot.lane.b32.xlu0 %v279, 80
        %v445 = vpop.permute.xlu0 %444
        %vm446 = vcmask 654336
        %v447 = vsel %vm446, %v443, %v445
        %v450 = vsel %vm446, %v445, 0.0
        %v451 = vstv %s441
        %v452 = vmul.f32 %v451, %v447
        %v453 = vmul.f32 %v451, %v450
        %v454 = vadd.f32 %v425, %v452
        %v455 = vadd.f32 %v426, %v453
        %s456 = sld [smem:[#allocation7 + $0x5b]]
        %457 = vrot.lane.b32.xlu0 %v280, 80
        %v458 = vpop.permute.xlu0 %457
        %459 = vrot.lane.b32.xlu0 %v281, 80
        %v460 = vpop.permute.xlu0 %459
        %v461 = vsel %vm446, %v458, %v460
        %v464 = vsel %vm446, %v460, 0.0
        %v465 = vstv %s456
        %v466 = vmul.f32 %v465, %v461
        %v467 = vmul.f32 %v465, %v464
        %v468 = vadd.f32 %v439, %v466
        %v469 = vadd.f32 %v440, %v467
        %470 = vrot.lane.b32.xlu0 %v221, 2
        %v471 = vpop.permute.xlu0 %470
        %472 = vrot.lane.b32.xlu0 %v222, 2
        %v473 = vpop.permute.xlu0 %472
        %vm474 = vcmask 15360
        %v475 = vsel %vm474, %v471, %v473
        %v478 = vsel %vm474, 0.0, %v471
        %479 = vrot.lane.b32.xlu0 %v229, 2
        %v480 = vpop.permute.xlu0 %479
        %481 = vrot.lane.b32.xlu0 %v236, 2
        %v482 = vpop.permute.xlu0 %481
        %v483 = vsel %vm474, %v480, %v482
        %v486 = vsel %vm474, 0.0, %v480
        %v487 = vadd.s32 %v250, 4294967294
        %vm488 = vcmp.ge.s32.totalorder %v487, 0
        %vm489 = vcmp.lt.s32.totalorder %v487, 16
        %vm490 = vmand %vm488, %vm489
        %v491 = vsel %vm490, 1, 0
        %v492 = vcvt.s32.f32 %v491
        %v493 = vmul.f32 %v478, %v492
        %v494 = vmul.f32 %v475, %v492
        %v495 = vmul.f32 %v486, %v492
        %v496 = vmul.f32 %v483, %v492
        %s497 = sld [smem:[#allocation7 + $0x1]]
        %500 = vrot.lane.b32.xlu0 %v493, 48
        %v501 = vpop.permute.xlu0 %500
        %502 = vrot.lane.b32.xlu0 %v494, 48
        %v503 = vpop.permute.xlu0 %502
        %v504 = vsel %vm289, %v501, %v503
        %v507 = vsel %vm289, 0.0, %v501
        %v508 = vstv %s497
        %v509 = vmul.f32 %v508, %v507
        %v510 = vmul.f32 %v508, %v504
        %v511 = vadd.f32 %v454, %v509
        %v512 = vadd.f32 %v455, %v510
        %s513 = sld [smem:[#allocation7 + $0x32]]
        %516 = vrot.lane.b32.xlu0 %v495, 48
        %v517 = vpop.permute.xlu0 %516
        %518 = vrot.lane.b32.xlu0 %v496, 48
        %v519 = vpop.permute.xlu0 %518
        %v520 = vsel %vm289, %v517, %v519
        %v523 = vsel %vm289, 0.0, %v517
        %v524 = vstv %s513
        %v525 = vmul.f32 %v524, %v523
        %v526 = vmul.f32 %v524, %v520
        %v527 = vadd.f32 %v468, %v525
        %v528 = vadd.f32 %v469, %v526
        %s529 = sld [smem:[#allocation7 + $0x8]]
        %530 = vrot.lane.b32.xlu0 %v493, 32
        %v531 = vpop.permute.xlu0 %530
        %532 = vrot.lane.b32.xlu0 %v494, 32
        %v533 = vpop.permute.xlu0 %532
        %v534 = vsel %vm245, %v531, %v533
        %v537 = vsel %vm245, 0.0, %v531
        %v538 = vstv %s529
        %v539 = vmul.f32 %v538, %v537
        %v540 = vmul.f32 %v538, %v534
        %v541 = vadd.f32 %v511, %v539
        %v542 = vadd.f32 %v512, %v540
        %s543 = sld [smem:[#allocation7 + $0x39]]
        %544 = vrot.lane.b32.xlu0 %v495, 32
        %v545 = vpop.permute.xlu0 %544
        %546 = vrot.lane.b32.xlu0 %v496, 32
        %v547 = vpop.permute.xlu0 %546
        %v548 = vsel %vm245, %v545, %v547
        %v551 = vsel %vm245, 0.0, %v545
        %v552 = vstv %s543
        %v553 = vmul.f32 %v552, %v551
        %v554 = vmul.f32 %v552, %v548
        %v555 = vadd.f32 %v527, %v553
        %v556 = vadd.f32 %v528, %v554
        %s557 = sld [smem:[#allocation7 + $0xf]]
        %558 = vrot.lane.b32.xlu0 %v493, 16
        %v559 = vpop.permute.xlu0 %558
        %560 = vrot.lane.b32.xlu0 %v494, 16
        %v561 = vpop.permute.xlu0 %560
        %v562 = vsel %vm241, %v559, %v561
        %v565 = vsel %vm241, 0.0, %v559
        %v566 = vstv %s557
        %v567 = vmul.f32 %v566, %v565
        %v568 = vmul.f32 %v566, %v562
        %v569 = vadd.f32 %v541, %v567
        %v570 = vadd.f32 %v542, %v568
        %s571 = sld [smem:[#allocation7 + $0x40]]
        %572 = vrot.lane.b32.xlu0 %v495, 16
        %v573 = vpop.permute.xlu0 %572
        %574 = vrot.lane.b32.xlu0 %v496, 16
        %v575 = vpop.permute.xlu0 %574
        %v576 = vsel %vm241, %v573, %v575
        %v579 = vsel %vm241, 0.0, %v573
        %v580 = vstv %s571
        %v581 = vmul.f32 %v580, %v579
        %v582 = vmul.f32 %v580, %v576
        %v583 = vadd.f32 %v555, %v581
        %v584 = vadd.f32 %v556, %v582
        %s585 = sld [smem:[#allocation7 + $0x16]]
        %v586 = vstv %s585
        %v587 = vmul.f32 %v586, %v493
        %v588 = vmul.f32 %v586, %v494
        %v589 = vadd.f32 %v569, %v587
        %v590 = vadd.f32 %v570, %v588
        %s591 = sld [smem:[#allocation7 + $0x47]]
        %v592 = vstv %s591
        %v593 = vmul.f32 %v592, %v495
        %v594 = vmul.f32 %v592, %v496
        %v595 = vadd.f32 %v583, %v593
        %v596 = vadd.f32 %v584, %v594
        %s597 = sld [smem:[#allocation7 + $0x1d]]
        %598 = vrot.lane.b32.xlu0 %v493, 112
        %v599 = vpop.permute.xlu0 %598
        %600 = vrot.lane.b32.xlu0 %v494, 112
        %v601 = vpop.permute.xlu0 %600
        %v602 = vsel %vm388, %v599, %v601
        %v605 = vsel %vm388, %v601, 0.0
        %v606 = vstv %s597
        %v607 = vmul.f32 %v606, %v602
        %v608 = vmul.f32 %v606, %v605
        %v609 = vadd.f32 %v589, %v607
        %v610 = vadd.f32 %v590, %v608
        %s611 = sld [smem:[#allocation7 + $0x4e]]
        %612 = vrot.lane.b32.xlu0 %v495, 112
        %v613 = vpop.permute.xlu0 %612
        %614 = vrot.lane.b32.xlu0 %v496, 112
        %v615 = vpop.permute.xlu0 %614
        %v616 = vsel %vm388, %v613, %v615
        %v619 = vsel %vm388, %v615, 0.0
        %v620 = vstv %s611
        %v621 = vmul.f32 %v620, %v616
        %v622 = vmul.f32 %v620, %v619
        %v623 = vadd.f32 %v595, %v621
        %v624 = vadd.f32 %v596, %v622
        %s625 = sld [smem:[#allocation7 + $0x24]]
        %626 = vrot.lane.b32.xlu0 %v493, 96
        %v627 = vpop.permute.xlu0 %626
        %628 = vrot.lane.b32.xlu0 %v494, 96
        %v629 = vpop.permute.xlu0 %628
        %v630 = vsel %vm417, %v627, %v629
        %v633 = vsel %vm417, %v629, 0.0
        %v634 = vstv %s625
        %v635 = vmul.f32 %v634, %v630
        %v636 = vmul.f32 %v634, %v633
        %v637 = vadd.f32 %v609, %v635
        %v638 = vadd.f32 %v610, %v636
        %s639 = sld [smem:[#allocation7 + $0x55]]
        %640 = vrot.lane.b32.xlu0 %v495, 96
        %v641 = vpop.permute.xlu0 %640
        %642 = vrot.lane.b32.xlu0 %v496, 96
        %v643 = vpop.permute.xlu0 %642
        %v644 = vsel %vm417, %v641, %v643
        %v647 = vsel %vm417, %v643, 0.0
        %v648 = vstv %s639
        %v649 = vmul.f32 %v648, %v644
        %v650 = vmul.f32 %v648, %v647
        %v651 = vadd.f32 %v623, %v649
        %v652 = vadd.f32 %v624, %v650
        %s653 = sld [smem:[#allocation7 + $0x2b]]
        %654 = vrot.lane.b32.xlu0 %v493, 80
        %v655 = vpop.permute.xlu0 %654
        %656 = vrot.lane.b32.xlu0 %v494, 80
        %v657 = vpop.permute.xlu0 %656
        %v658 = vsel %vm446, %v655, %v657
        %v661 = vsel %vm446, %v657, 0.0
        %v662 = vstv %s653
        %v663 = vmul.f32 %v662, %v658
        %v664 = vmul.f32 %v662, %v661
        %v665 = vadd.f32 %v637, %v663
        %v666 = vadd.f32 %v638, %v664
        %s667 = sld [smem:[#allocation7 + $0x5c]]
        %668 = vrot.lane.b32.xlu0 %v495, 80
        %v669 = vpop.permute.xlu0 %668
        %670 = vrot.lane.b32.xlu0 %v496, 80
        %v671 = vpop.permute.xlu0 %670
        %v672 = vsel %vm446, %v669, %v671
        %v675 = vsel %vm446, %v671, 0.0
        %v676 = vstv %s667
        %v677 = vmul.f32 %v676, %v672
        %v678 = vmul.f32 %v676, %v675
        %v679 = vadd.f32 %v651, %v677
        %v680 = vadd.f32 %v652, %v678
        %681 = vrot.lane.b32.xlu0 %v221, 1
        %v682 = vpop.permute.xlu0 %681
        %683 = vrot.lane.b32.xlu0 %v222, 1
        %v684 = vpop.permute.xlu0 %683
        %vm685 = vcmask 7168
        %v686 = vsel %vm685, %v682, %v684
        %v689 = vsel %vm685, 0.0, %v682
        %690 = vrot.lane.b32.xlu0 %v229, 1
        %v691 = vpop.permute.xlu0 %690
        %692 = vrot.lane.b32.xlu0 %v236, 1
        %v693 = vpop.permute.xlu0 %692
        %v694 = vsel %vm685, %v691, %v693
        %v697 = vsel %vm685, 0.0, %v691
        %v698 = vadd.s32 %v250, 4294967295
        %vm699 = vcmp.ge.s32.totalorder %v698, 0
        %vm700 = vcmp.lt.s32.totalorder %v698, 16
        %vm701 = vmand %vm699, %vm700
        %v702 = vsel %vm701, 1, 0
        %v703 = vcvt.s32.f32 %v702
        %v704 = vmul.f32 %v689, %v703
        %v705 = vmul.f32 %v686, %v703
        %v706 = vmul.f32 %v697, %v703
        %v707 = vmul.f32 %v694, %v703
        %s708 = sld [smem:[#allocation7 + $0x2]]
        %711 = vrot.lane.b32.xlu0 %v704, 48
        %v712 = vpop.permute.xlu0 %711
        %713 = vrot.lane.b32.xlu0 %v705, 48
        %v714 = vpop.permute.xlu0 %713
        %v715 = vsel %vm289, %v712, %v714
        %v718 = vsel %vm289, 0.0, %v712
        %v719 = vstv %s708
        %v720 = vmul.f32 %v719, %v718
        %v721 = vmul.f32 %v719, %v715
        %v722 = vadd.f32 %v665, %v720
        %v723 = vadd.f32 %v666, %v721
        %s724 = sld [smem:[#allocation7 + $0x33]]
        %727 = vrot.lane.b32.xlu0 %v706, 48
        %v728 = vpop.permute.xlu0 %727
        %729 = vrot.lane.b32.xlu0 %v707, 48
        %v730 = vpop.permute.xlu0 %729
        %v731 = vsel %vm289, %v728, %v730
        %v734 = vsel %vm289, 0.0, %v728
        %v735 = vstv %s724
        %v736 = vmul.f32 %v735, %v734
        %v737 = vmul.f32 %v735, %v731
        %v738 = vadd.f32 %v679, %v736
        %v739 = vadd.f32 %v680, %v737
        %s740 = sld [smem:[#allocation7 + $0x9]]
        %741 = vrot.lane.b32.xlu0 %v704, 32
        %v742 = vpop.permute.xlu0 %741
        %743 = vrot.lane.b32.xlu0 %v705, 32
        %v744 = vpop.permute.xlu0 %743
        %v745 = vsel %vm245, %v742, %v744
        %v748 = vsel %vm245, 0.0, %v742
        %v749 = vstv %s740
        %v750 = vmul.f32 %v749, %v748
        %v751 = vmul.f32 %v749, %v745
        %v752 = vadd.f32 %v722, %v750
        %v753 = vadd.f32 %v723, %v751
        %s754 = sld [smem:[#allocation7 + $0x3a]]
        %755 = vrot.lane.b32.xlu0 %v706, 32
        %v756 = vpop.permute.xlu0 %755
        %757 = vrot.lane.b32.xlu0 %v707, 32
        %v758 = vpop.permute.xlu0 %757
        %v759 = vsel %vm245, %v756, %v758
        %v762 = vsel %vm245, 0.0, %v756
        %v763 = vstv %s754
        %v764 = vmul.f32 %v763, %v762
        %v765 = vmul.f32 %v763, %v759
        %v766 = vadd.f32 %v738, %v764
        %v767 = vadd.f32 %v739, %v765
        %s768 = sld [smem:[#allocation7 + $0x10]]
        %769 = vrot.lane.b32.xlu0 %v704, 16
        %v770 = vpop.permute.xlu0 %769
        %771 = vrot.lane.b32.xlu0 %v705, 16
        %v772 = vpop.permute.xlu0 %771
        %v773 = vsel %vm241, %v770, %v772
        %v776 = vsel %vm241, 0.0, %v770
        %v777 = vstv %s768
        %v778 = vmul.f32 %v777, %v776
        %v779 = vmul.f32 %v777, %v773
        %v780 = vadd.f32 %v752, %v778
        %v781 = vadd.f32 %v753, %v779
        %s782 = sld [smem:[#allocation7 + $0x41]]
        %783 = vrot.lane.b32.xlu0 %v706, 16
        %v784 = vpop.permute.xlu0 %783
        %785 = vrot.lane.b32.xlu0 %v707, 16
        %v786 = vpop.permute.xlu0 %785
        %v787 = vsel %vm241, %v784, %v786
        %v790 = vsel %vm241, 0.0, %v784
        %v791 = vstv %s782
        %v792 = vmul.f32 %v791, %v790
        %v793 = vmul.f32 %v791, %v787
        %v794 = vadd.f32 %v766, %v792
        %v795 = vadd.f32 %v767, %v793
        %s796 = sld [smem:[#allocation7 + $0x17]]
        %v797 = vstv %s796
        %v798 = vmul.f32 %v797, %v704
        %v799 = vmul.f32 %v797, %v705
        %v800 = vadd.f32 %v780, %v798
        %v801 = vadd.f32 %v781, %v799
        %s802 = sld [smem:[#allocation7 + $0x48]]
        %v803 = vstv %s802
        %v804 = vmul.f32 %v803, %v706
        %v805 = vmul.f32 %v803, %v707
        %v806 = vadd.f32 %v794, %v804
        %v807 = vadd.f32 %v795, %v805
        %s808 = sld [smem:[#allocation7 + $0x1e]]
        %809 = vrot.lane.b32.xlu0 %v704, 112
        %v810 = vpop.permute.xlu0 %809
        %811 = vrot.lane.b32.xlu0 %v705, 112
        %v812 = vpop.permute.xlu0 %811
        %v813 = vsel %vm388, %v810, %v812
        %v816 = vsel %vm388, %v812, 0.0
        %v817 = vstv %s808
        %v818 = vmul.f32 %v817, %v813
        %v819 = vmul.f32 %v817, %v816
        %v820 = vadd.f32 %v800, %v818
        %v821 = vadd.f32 %v801, %v819
        %s822 = sld [smem:[#allocation7 + $0x4f]]
        %823 = vrot.lane.b32.xlu0 %v706, 112
        %v824 = vpop.permute.xlu0 %823
        %825 = vrot.lane.b32.xlu0 %v707, 112
        %v826 = vpop.permute.xlu0 %825
        %v827 = vsel %vm388, %v824, %v826
        %v830 = vsel %vm388, %v826, 0.0
        %v831 = vstv %s822
        %v832 = vmul.f32 %v831, %v827
        %v833 = vmul.f32 %v831, %v830
        %v834 = vadd.f32 %v806, %v832
        %v835 = vadd.f32 %v807, %v833
        %s836 = sld [smem:[#allocation7 + $0x25]]
        %837 = vrot.lane.b32.xlu0 %v704, 96
        %v838 = vpop.permute.xlu0 %837
        %839 = vrot.lane.b32.xlu0 %v705, 96
        %v840 = vpop.permute.xlu0 %839
        %v841 = vsel %vm417, %v838, %v840
        %v844 = vsel %vm417, %v840, 0.0
        %v845 = vstv %s836
        %v846 = vmul.f32 %v845, %v841
        %v847 = vmul.f32 %v845, %v844
        %v848 = vadd.f32 %v820, %v846
        %v849 = vadd.f32 %v821, %v847
        %s850 = sld [smem:[#allocation7 + $0x56]]
        %851 = vrot.lane.b32.xlu0 %v706, 96
        %v852 = vpop.permute.xlu0 %851
        %853 = vrot.lane.b32.xlu0 %v707, 96
        %v854 = vpop.permute.xlu0 %853
        %v855 = vsel %vm417, %v852, %v854
        %v858 = vsel %vm417, %v854, 0.0
        %v859 = vstv %s850
        %v860 = vmul.f32 %v859, %v855
        %v861 = vmul.f32 %v859, %v858
        %v862 = vadd.f32 %v834, %v860
        %v863 = vadd.f32 %v835, %v861
        %s864 = sld [smem:[#allocation7 + $0x2c]]
        %865 = vrot.lane.b32.xlu0 %v704, 80
        %v866 = vpop.permute.xlu0 %865
        %867 = vrot.lane.b32.xlu0 %v705, 80
        %v868 = vpop.permute.xlu0 %867
        %v869 = vsel %vm446, %v866, %v868
        %v872 = vsel %vm446, %v868, 0.0
        %v873 = vstv %s864
        %v874 = vmul.f32 %v873, %v869
        %v875 = vmul.f32 %v873, %v872
        %v876 = vadd.f32 %v848, %v874
        %v877 = vadd.f32 %v849, %v875
        %s878 = sld [smem:[#allocation7 + $0x5d]]
        %879 = vrot.lane.b32.xlu0 %v706, 80
        %v880 = vpop.permute.xlu0 %879
        %881 = vrot.lane.b32.xlu0 %v707, 80
        %v882 = vpop.permute.xlu0 %881
        %v883 = vsel %vm446, %v880, %v882
        %v886 = vsel %vm446, %v882, 0.0
        %v887 = vstv %s878
        %v888 = vmul.f32 %v887, %v883
        %v889 = vmul.f32 %v887, %v886
        %v890 = vadd.f32 %v862, %v888
        %v891 = vadd.f32 %v863, %v889
        %s892 = sld [smem:[#allocation7 + $0x3]]
        %893 = vrot.lane.b32.xlu0 %v221, 48
        %v894 = vpop.permute.xlu0 %893
        %895 = vrot.lane.b32.xlu0 %v222, 48
        %v896 = vpop.permute.xlu0 %895
        %v897 = vsel %vm289, %v894, %v896
        %v900 = vsel %vm289, 0.0, %v894
        %v901 = vstv %s892
        %v902 = vmul.f32 %v901, %v900
        %v903 = vmul.f32 %v901, %v897
        %v904 = vadd.f32 %v876, %v902
        %v905 = vadd.f32 %v877, %v903
        %s906 = sld [smem:[#allocation7 + $0x34]]
        %907 = vrot.lane.b32.xlu0 %v229, 48
        %v908 = vpop.permute.xlu0 %907
        %909 = vrot.lane.b32.xlu0 %v236, 48
        %v910 = vpop.permute.xlu0 %909
        %v911 = vsel %vm289, %v908, %v910
        %v914 = vsel %vm289, 0.0, %v908
        %v915 = vstv %s906
        %v916 = vmul.f32 %v915, %v914
        %v917 = vmul.f32 %v915, %v911
        %v918 = vadd.f32 %v890, %v916
        %v919 = vadd.f32 %v891, %v917
        %s920 = sld [smem:[#allocation7 + $0xa]]
        %921 = vrot.lane.b32.xlu0 %v221, 32
        %v922 = vpop.permute.xlu0 %921
        %923 = vrot.lane.b32.xlu0 %v222, 32
        %v924 = vpop.permute.xlu0 %923
        %v925 = vsel %vm245, %v922, %v924
        %v928 = vsel %vm245, 0.0, %v922
        %v929 = vstv %s920
        %v930 = vmul.f32 %v929, %v928
        %v931 = vmul.f32 %v929, %v925
        %v932 = vadd.f32 %v904, %v930
        %v933 = vadd.f32 %v905, %v931
        %s934 = sld [smem:[#allocation7 + $0x3b]]
        %935 = vrot.lane.b32.xlu0 %v229, 32
        %v936 = vpop.permute.xlu0 %935
        %937 = vrot.lane.b32.xlu0 %v236, 32
        %v938 = vpop.permute.xlu0 %937
        %v939 = vsel %vm245, %v936, %v938
        %v942 = vsel %vm245, 0.0, %v936
        %v943 = vstv %s934
        %v944 = vmul.f32 %v943, %v942
        %v945 = vmul.f32 %v943, %v939
        %v946 = vadd.f32 %v918, %v944
        %v947 = vadd.f32 %v919, %v945
        %s948 = sld [smem:[#allocation7 + $0x11]]
        %949 = vrot.lane.b32.xlu0 %v221, 16
        %v950 = vpop.permute.xlu0 %949
        %951 = vrot.lane.b32.xlu0 %v222, 16
        %v952 = vpop.permute.xlu0 %951
        %v953 = vsel %vm241, %v950, %v952
        %v956 = vsel %vm241, 0.0, %v950
        %v957 = vstv %s948
        %v958 = vmul.f32 %v957, %v956
        %v959 = vmul.f32 %v957, %v953
        %v960 = vadd.f32 %v932, %v958
        %v961 = vadd.f32 %v933, %v959
        %s962 = sld [smem:[#allocation7 + $0x42]]
        %963 = vrot.lane.b32.xlu0 %v229, 16
        %v964 = vpop.permute.xlu0 %963
        %965 = vrot.lane.b32.xlu0 %v236, 16
        %v966 = vpop.permute.xlu0 %965
        %v967 = vsel %vm241, %v964, %v966
        %v970 = vsel %vm241, 0.0, %v964
        %v971 = vstv %s962
        %v972 = vmul.f32 %v971, %v970
        %v973 = vmul.f32 %v971, %v967
        %v974 = vadd.f32 %v946, %v972
        %v975 = vadd.f32 %v947, %v973
        %s976 = sld [smem:[#allocation7 + $0x18]]
        %v977 = vstv %s976
        %v978 = vmul.f32 %v977, %v221
        %v979 = vmul.f32 %v977, %v222
        %v980 = vadd.f32 %v960, %v978
        %v981 = vadd.f32 %v961, %v979
        %s982 = sld [smem:[#allocation7 + $0x49]]
        %v983 = vstv %s982
        %v984 = vmul.f32 %v983, %v229
        %v985 = vmul.f32 %v983, %v236
        %v986 = vadd.f32 %v974, %v984
        %v987 = vadd.f32 %v975, %v985
        %s988 = sld [smem:[#allocation7 + $0x1f]]
        %989 = vrot.lane.b32.xlu0 %v221, 112
        %v990 = vpop.permute.xlu0 %989
        %991 = vrot.lane.b32.xlu0 %v222, 112
        %v992 = vpop.permute.xlu0 %991
        %v993 = vsel %vm388, %v990, %v992
        %v996 = vsel %vm388, %v992, 0.0
        %v997 = vstv %s988
        %v998 = vmul.f32 %v997, %v993
        %v999 = vmul.f32 %v997, %v996
        %v1000 = vadd.f32 %v980, %v998
        %v1001 = vadd.f32 %v981, %v999
        %s1002 = sld [smem:[#allocation7 + $0x50]]
        %1003 = vrot.lane.b32.xlu0 %v229, 112
        %v1004 = vpop.permute.xlu0 %1003
        %1005 = vrot.lane.b32.xlu0 %v236, 112
        %v1006 = vpop.permute.xlu0 %1005
        %v1007 = vsel %vm388, %v1004, %v1006
        %v1010 = vsel %vm388, %v1006, 0.0
        %v1011 = vstv %s1002
        %v1012 = vmul.f32 %v1011, %v1007
        %v1013 = vmul.f32 %v1011, %v1010
        %v1014 = vadd.f32 %v986, %v1012
        %v1015 = vadd.f32 %v987, %v1013
        %s1016 = sld [smem:[#allocation7 + $0x26]]
        %1017 = vrot.lane.b32.xlu0 %v221, 96
        %v1018 = vpop.permute.xlu0 %1017
        %1019 = vrot.lane.b32.xlu0 %v222, 96
        %v1020 = vpop.permute.xlu0 %1019
        %v1021 = vsel %vm417, %v1018, %v1020
        %v1024 = vsel %vm417, %v1020, 0.0
        %v1025 = vstv %s1016
        %v1026 = vmul.f32 %v1025, %v1021
        %v1027 = vmul.f32 %v1025, %v1024
        %v1028 = vadd.f32 %v1000, %v1026
        %v1029 = vadd.f32 %v1001, %v1027
        %s1030 = sld [smem:[#allocation7 + $0x57]]
        %1031 = vrot.lane.b32.xlu0 %v229, 96
        %v1032 = vpop.permute.xlu0 %1031
        %1033 = vrot.lane.b32.xlu0 %v236, 96
        %v1034 = vpop.permute.xlu0 %1033
        %v1035 = vsel %vm417, %v1032, %v1034
        %v1038 = vsel %vm417, %v1034, 0.0
        %v1039 = vstv %s1030
        %v1040 = vmul.f32 %v1039, %v1035
        %v1041 = vmul.f32 %v1039, %v1038
        %v1042 = vadd.f32 %v1014, %v1040
        %v1043 = vadd.f32 %v1015, %v1041
        %s1044 = sld [smem:[#allocation7 + $0x2d]]
        %1045 = vrot.lane.b32.xlu0 %v221, 80
        %v1046 = vpop.permute.xlu0 %1045
        %1047 = vrot.lane.b32.xlu0 %v222, 80
        %v1048 = vpop.permute.xlu0 %1047
        %v1049 = vsel %vm446, %v1046, %v1048
        %v1052 = vsel %vm446, %v1048, 0.0
        %v1053 = vstv %s1044
        %v1054 = vmul.f32 %v1053, %v1049
        %v1055 = vmul.f32 %v1053, %v1052
        %v1056 = vadd.f32 %v1028, %v1054
        %v1057 = vadd.f32 %v1029, %v1055
        %s1058 = sld [smem:[#allocation7 + $0x5e]]
        %1059 = vrot.lane.b32.xlu0 %v229, 80
        %v1060 = vpop.permute.xlu0 %1059
        %1061 = vrot.lane.b32.xlu0 %v236, 80
        %v1062 = vpop.permute.xlu0 %1061
        %v1063 = vsel %vm446, %v1060, %v1062
        %v1066 = vsel %vm446, %v1062, 0.0
        %v1067 = vstv %s1058
        %v1068 = vmul.f32 %v1067, %v1063
        %v1069 = vmul.f32 %v1067, %v1066
        %v1070 = vadd.f32 %v1042, %v1068
        %v1071 = vadd.f32 %v1043, %v1069
        %1072 = vrot.lane.b32.xlu0 %v221, 127
        %v1073 = vpop.permute.xlu0 %1072
        %1074 = vrot.lane.b32.xlu0 %v222, 127
        %v1075 = vpop.permute.xlu0 %1074
        %vm1076 = vcmask 1039360
        %v1077 = vsel %vm1076, %v1073, %v1075
        %v1080 = vsel %vm1076, %v1075, 0.0
        %1081 = vrot.lane.b32.xlu0 %v229, 127
        %v1082 = vpop.permute.xlu0 %1081
        %1083 = vrot.lane.b32.xlu0 %v236, 127
        %v1084 = vpop.permute.xlu0 %1083
        %v1085 = vsel %vm1076, %v1082, %v1084
        %v1088 = vsel %vm1076, %v1084, 0.0
        %v1089 = vadd.s32 %v250, 1
        %vm1090 = vcmp.ge.s32.totalorder %v1089, 0
        %vm1091 = vcmp.lt.s32.totalorder %v1089, 16
        %vm1092 = vmand %vm1090, %vm1091
        %v1093 = vsel %vm1092, 1, 0
        %v1094 = vcvt.s32.f32 %v1093
        %v1095 = vmul.f32 %v1077, %v1094
        %v1096 = vmul.f32 %v1080, %v1094
        %v1097 = vmul.f32 %v1085, %v1094
        %v1098 = vmul.f32 %v1088, %v1094
        %s1099 = sld [smem:[#allocation7 + $0x4]]
        %1102 = vrot.lane.b32.xlu0 %v1095, 48
        %v1103 = vpop.permute.xlu0 %1102
        %1104 = vrot.lane.b32.xlu0 %v1096, 48
        %v1105 = vpop.permute.xlu0 %1104
        %v1106 = vsel %vm289, %v1103, %v1105
        %v1109 = vsel %vm289, 0.0, %v1103
        %v1110 = vstv %s1099
        %v1111 = vmul.f32 %v1110, %v1109
        %v1112 = vmul.f32 %v1110, %v1106
        %v1113 = vadd.f32 %v1056, %v1111
        %v1114 = vadd.f32 %v1057, %v1112
        %s1115 = sld [smem:[#allocation7 + $0x35]]
        %1118 = vrot.lane.b32.xlu0 %v1097, 48
        %v1119 = vpop.permute.xlu0 %1118
        %1120 = vrot.lane.b32.xlu0 %v1098, 48
        %v1121 = vpop.permute.xlu0 %1120
        %v1122 = vsel %vm289, %v1119, %v1121
        %v1125 = vsel %vm289, 0.0, %v1119
        %v1126 = vstv %s1115
        %v1127 = vmul.f32 %v1126, %v1125
        %v1128 = vmul.f32 %v1126, %v1122
        %v1129 = vadd.f32 %v1070, %v1127
        %v1130 = vadd.f32 %v1071, %v1128
        %s1131 = sld [smem:[#allocation7 + $0xb]]
        %1132 = vrot.lane.b32.xlu0 %v1095, 32
        %v1133 = vpop.permute.xlu0 %1132
        %1134 = vrot.lane.b32.xlu0 %v1096, 32
        %v1135 = vpop.permute.xlu0 %1134
        %v1136 = vsel %vm245, %v1133, %v1135
        %v1139 = vsel %vm245, 0.0, %v1133
        %v1140 = vstv %s1131
        %v1141 = vmul.f32 %v1140, %v1139
        %v1142 = vmul.f32 %v1140, %v1136
        %v1143 = vadd.f32 %v1113, %v1141
        %v1144 = vadd.f32 %v1114, %v1142
        %s1145 = sld [smem:[#allocation7 + $0x3c]]
        %1146 = vrot.lane.b32.xlu0 %v1097, 32
        %v1147 = vpop.permute.xlu0 %1146
        %1148 = vrot.lane.b32.xlu0 %v1098, 32
        %v1149 = vpop.permute.xlu0 %1148
        %v1150 = vsel %vm245, %v1147, %v1149
        %v1153 = vsel %vm245, 0.0, %v1147
        %v1154 = vstv %s1145
        %v1155 = vmul.f32 %v1154, %v1153
        %v1156 = vmul.f32 %v1154, %v1150
        %v1157 = vadd.f32 %v1129, %v1155
        %v1158 = vadd.f32 %v1130, %v1156
        %s1159 = sld [smem:[#allocation7 + $0x12]]
        %1160 = vrot.lane.b32.xlu0 %v1095, 16
        %v1161 = vpop.permute.xlu0 %1160
        %1162 = vrot.lane.b32.xlu0 %v1096, 16
        %v1163 = vpop.permute.xlu0 %1162
        %v1164 = vsel %vm241, %v1161, %v1163
        %v1167 = vsel %vm241, 0.0, %v1161
        %v1168 = vstv %s1159
        %v1169 = vmul.f32 %v1168, %v1167
        %v1170 = vmul.f32 %v1168, %v1164
        %v1171 = vadd.f32 %v1143, %v1169
        %v1172 = vadd.f32 %v1144, %v1170
        %s1173 = sld [smem:[#allocation7 + $0x43]]
        %1174 = vrot.lane.b32.xlu0 %v1097, 16
        %v1175 = vpop.permute.xlu0 %1174
        %1176 = vrot.lane.b32.xlu0 %v1098, 16
        %v1177 = vpop.permute.xlu0 %1176
        %v1178 = vsel %vm241, %v1175, %v1177
        %v1181 = vsel %vm241, 0.0, %v1175
        %v1182 = vstv %s1173
        %v1183 = vmul.f32 %v1182, %v1181
        %v1184 = vmul.f32 %v1182, %v1178
        %v1185 = vadd.f32 %v1157, %v1183
        %v1186 = vadd.f32 %v1158, %v1184
        %s1187 = sld [smem:[#allocation7 + $0x19]]
        %v1188 = vstv %s1187
        %v1189 = vmul.f32 %v1188, %v1095
        %v1190 = vmul.f32 %v1188, %v1096
        %v1191 = vadd.f32 %v1171, %v1189
        %v1192 = vadd.f32 %v1172, %v1190
        %s1193 = sld [smem:[#allocation7 + $0x4a]]
        %v1194 = vstv %s1193
        %v1195 = vmul.f32 %v1194, %v1097
        %v1196 = vmul.f32 %v1194, %v1098
        %v1197 = vadd.f32 %v1185, %v1195
        %v1198 = vadd.f32 %v1186, %v1196
        %s1199 = sld [smem:[#allocation7 + $0x20]]
        %1200 = vrot.lane.b32.xlu0 %v1095, 112
        %v1201 = vpop.permute.xlu0 %1200
        %1202 = vrot.lane.b32.xlu0 %v1096, 112
        %v1203 = vpop.permute.xlu0 %1202
        %v1204 = vsel %vm388, %v1201, %v1203
        %v1207 = vsel %vm388, %v1203, 0.0
        %v1208 = vstv %s1199
        %v1209 = vmul.f32 %v1208, %v1204
        %v1210 = vmul.f32 %v1208, %v1207
        %v1211 = vadd.f32 %v1191, %v1209
        %v1212 = vadd.f32 %v1192, %v1210
        %s1213 = sld [smem:[#allocation7 + $0x51]]
        %1214 = vrot.lane.b32.xlu0 %v1097, 112
        %v1215 = vpop.permute.xlu0 %1214
        %1216 = vrot.lane.b32.xlu0 %v1098, 112
        %v1217 = vpop.permute.xlu0 %1216
        %v1218 = vsel %vm388, %v1215, %v1217
        %v1221 = vsel %vm388, %v1217, 0.0
        %v1222 = vstv %s1213
        %v1223 = vmul.f32 %v1222, %v1218
        %v1224 = vmul.f32 %v1222, %v1221
        %v1225 = vadd.f32 %v1197, %v1223
        %v1226 = vadd.f32 %v1198, %v1224
        %s1227 = sld [smem:[#allocation7 + $0x27]]
        %1228 = vrot.lane.b32.xlu0 %v1095, 96
        %v1229 = vpop.permute.xlu0 %1228
        %1230 = vrot.lane.b32.xlu0 %v1096, 96
        %v1231 = vpop.permute.xlu0 %1230
        %v1232 = vsel %vm417, %v1229, %v1231
        %v1235 = vsel %vm417, %v1231, 0.0
        %v1236 = vstv %s1227
        %v1237 = vmul.f32 %v1236, %v1232
        %v1238 = vmul.f32 %v1236, %v1235
        %v1239 = vadd.f32 %v1211, %v1237
        %v1240 = vadd.f32 %v1212, %v1238
        %s1241 = sld [smem:[#allocation7 + $0x58]]
        %1242 = vrot.lane.b32.xlu0 %v1097, 96
        %v1243 = vpop.permute.xlu0 %1242
        %1244 = vrot.lane.b32.xlu0 %v1098, 96
        %v1245 = vpop.permute.xlu0 %1244
        %v1246 = vsel %vm417, %v1243, %v1245
        %v1249 = vsel %vm417, %v1245, 0.0
        %v1250 = vstv %s1241
        %v1251 = vmul.f32 %v1250, %v1246
        %v1252 = vmul.f32 %v1250, %v1249
        %v1253 = vadd.f32 %v1225, %v1251
        %v1254 = vadd.f32 %v1226, %v1252
        %s1255 = sld [smem:[#allocation7 + $0x2e]]
        %1256 = vrot.lane.b32.xlu0 %v1095, 80
        %v1257 = vpop.permute.xlu0 %1256
        %1258 = vrot.lane.b32.xlu0 %v1096, 80
        %v1259 = vpop.permute.xlu0 %1258
        %v1260 = vsel %vm446, %v1257, %v1259
        %v1263 = vsel %vm446, %v1259, 0.0
        %v1264 = vstv %s1255
        %v1265 = vmul.f32 %v1264, %v1260
        %v1266 = vmul.f32 %v1264, %v1263
        %v1267 = vadd.f32 %v1239, %v1265
        %v1268 = vadd.f32 %v1240, %v1266
        %s1269 = sld [smem:[#allocation7 + $0x5f]]
        %1270 = vrot.lane.b32.xlu0 %v1097, 80
        %v1271 = vpop.permute.xlu0 %1270
        %1272 = vrot.lane.b32.xlu0 %v1098, 80
        %v1273 = vpop.permute.xlu0 %1272
        %v1274 = vsel %vm446, %v1271, %v1273
        %v1277 = vsel %vm446, %v1273, 0.0
        %v1278 = vstv %s1269
        %v1279 = vmul.f32 %v1278, %v1274
        %v1280 = vmul.f32 %v1278, %v1277
        %v1281 = vadd.f32 %v1253, %v1279
        %v1282 = vadd.f32 %v1254, %v1280
        %1283 = vrot.lane.b32.xlu0 %v221, 126
        %v1284 = vpop.permute.xlu0 %1283
        %1285 = vrot.lane.b32.xlu0 %v222, 126
        %v1286 = vpop.permute.xlu0 %1285
        %vm1287 = vcmask 1031168
        %v1288 = vsel %vm1287, %v1284, %v1286
        %v1291 = vsel %vm1287, %v1286, 0.0
        %1292 = vrot.lane.b32.xlu0 %v229, 126
        %v1293 = vpop.permute.xlu0 %1292
        %1294 = vrot.lane.b32.xlu0 %v236, 126
        %v1295 = vpop.permute.xlu0 %1294
        %v1296 = vsel %vm1287, %v1293, %v1295
        %v1299 = vsel %vm1287, %v1295, 0.0
        %v1300 = vadd.s32 %v250, 2
        %vm1301 = vcmp.ge.s32.totalorder %v1300, 0
        %vm1302 = vcmp.lt.s32.totalorder %v1300, 16
        %vm1303 = vmand %vm1301, %vm1302
        %v1304 = vsel %vm1303, 1, 0
        %v1305 = vcvt.s32.f32 %v1304
        %v1306 = vmul.f32 %v1288, %v1305
        %v1307 = vmul.f32 %v1291, %v1305
        %v1308 = vmul.f32 %v1296, %v1305
        %v1309 = vmul.f32 %v1299, %v1305
        %s1310 = sld [smem:[#allocation7 + $0x5]]
        %1313 = vrot.lane.b32.xlu0 %v1306, 48
        %v1314 = vpop.permute.xlu0 %1313
        %1315 = vrot.lane.b32.xlu0 %v1307, 48
        %v1316 = vpop.permute.xlu0 %1315
        %v1317 = vsel %vm289, %v1314, %v1316
        %v1320 = vsel %vm289, 0.0, %v1314
        %v1321 = vstv %s1310
        %v1322 = vmul.f32 %v1321, %v1320
        %v1323 = vmul.f32 %v1321, %v1317
        %v1324 = vadd.f32 %v1267, %v1322
        %v1325 = vadd.f32 %v1268, %v1323
        %s1326 = sld [smem:[#allocation7 + $0x36]]
        %1329 = vrot.lane.b32.xlu0 %v1308, 48
        %v1330 = vpop.permute.xlu0 %1329
        %1331 = vrot.lane.b32.xlu0 %v1309, 48
        %v1332 = vpop.permute.xlu0 %1331
        %v1333 = vsel %vm289, %v1330, %v1332
        %v1336 = vsel %vm289, 0.0, %v1330
        %v1337 = vstv %s1326
        %v1338 = vmul.f32 %v1337, %v1336
        %v1339 = vmul.f32 %v1337, %v1333
        %v1340 = vadd.f32 %v1281, %v1338
        %v1341 = vadd.f32 %v1282, %v1339
        %s1342 = sld [smem:[#allocation7 + $0xc]]
        %1343 = vrot.lane.b32.xlu0 %v1306, 32
        %v1344 = vpop.permute.xlu0 %1343
        %1345 = vrot.lane.b32.xlu0 %v1307, 32
        %v1346 = vpop.permute.xlu0 %1345
        %v1347 = vsel %vm245, %v1344, %v1346
        %v1350 = vsel %vm245, 0.0, %v1344
        %v1351 = vstv %s1342
        %v1352 = vmul.f32 %v1351, %v1350
        %v1353 = vmul.f32 %v1351, %v1347
        %v1354 = vadd.f32 %v1324, %v1352
        %v1355 = vadd.f32 %v1325, %v1353
        %s1356 = sld [smem:[#allocation7 + $0x3d]]
        %1357 = vrot.lane.b32.xlu0 %v1308, 32
        %v1358 = vpop.permute.xlu0 %1357
        %1359 = vrot.lane.b32.xlu0 %v1309, 32
        %v1360 = vpop.permute.xlu0 %1359
        %v1361 = vsel %vm245, %v1358, %v1360
        %v1364 = vsel %vm245, 0.0, %v1358
        %v1365 = vstv %s1356
        %v1366 = vmul.f32 %v1365, %v1364
        %v1367 = vmul.f32 %v1365, %v1361
        %v1368 = vadd.f32 %v1340, %v1366
        %v1369 = vadd.f32 %v1341, %v1367
        %s1370 = sld [smem:[#allocation7 + $0x13]]
        %1371 = vrot.lane.b32.xlu0 %v1306, 16
        %v1372 = vpop.permute.xlu0 %1371
        %1373 = vrot.lane.b32.xlu0 %v1307, 16
        %v1374 = vpop.permute.xlu0 %1373
        %v1375 = vsel %vm241, %v1372, %v1374
        %v1378 = vsel %vm241, 0.0, %v1372
        %v1379 = vstv %s1370
        %v1380 = vmul.f32 %v1379, %v1378
        %v1381 = vmul.f32 %v1379, %v1375
        %v1382 = vadd.f32 %v1354, %v1380
        %v1383 = vadd.f32 %v1355, %v1381
        %s1384 = sld [smem:[#allocation7 + $0x44]]
        %1385 = vrot.lane.b32.xlu0 %v1308, 16
        %v1386 = vpop.permute.xlu0 %1385
        %1387 = vrot.lane.b32.xlu0 %v1309, 16
        %v1388 = vpop.permute.xlu0 %1387
        %v1389 = vsel %vm241, %v1386, %v1388
        %v1392 = vsel %vm241, 0.0, %v1386
        %v1393 = vstv %s1384
        %v1394 = vmul.f32 %v1393, %v1392
        %v1395 = vmul.f32 %v1393, %v1389
        %v1396 = vadd.f32 %v1368, %v1394
        %v1397 = vadd.f32 %v1369, %v1395
        %s1398 = sld [smem:[#allocation7 + $0x1a]]
        %v1399 = vstv %s1398
        %v1400 = vmul.f32 %v1399, %v1306
        %v1401 = vmul.f32 %v1399, %v1307
        %v1402 = vadd.f32 %v1382, %v1400
        %v1403 = vadd.f32 %v1383, %v1401
        %s1404 = sld [smem:[#allocation7 + $0x4b]]
        %v1405 = vstv %s1404
        %v1406 = vmul.f32 %v1405, %v1308
        %v1407 = vmul.f32 %v1405, %v1309
        %v1408 = vadd.f32 %v1396, %v1406
        %v1409 = vadd.f32 %v1397, %v1407
        %s1410 = sld [smem:[#allocation7 + $0x21]]
        %1411 = vrot.lane.b32.xlu0 %v1306, 112
        %v1412 = vpop.permute.xlu0 %1411
        %1413 = vrot.lane.b32.xlu0 %v1307, 112
        %v1414 = vpop.permute.xlu0 %1413
        %v1415 = vsel %vm388, %v1412, %v1414
        %v1418 = vsel %vm388, %v1414, 0.0
        %v1419 = vstv %s1410
        %v1420 = vmul.f32 %v1419, %v1415
        %v1421 = vmul.f32 %v1419, %v1418
        %v1422 = vadd.f32 %v1402, %v1420
        %v1423 = vadd.f32 %v1403, %v1421
        %s1424 = sld [smem:[#allocation7 + $0x52]]
        %1425 = vrot.lane.b32.xlu0 %v1308, 112
        %v1426 = vpop.permute.xlu0 %1425
        %1427 = vrot.lane.b32.xlu0 %v1309, 112
        %v1428 = vpop.permute.xlu0 %1427
        %v1429 = vsel %vm388, %v1426, %v1428
        %v1432 = vsel %vm388, %v1428, 0.0
        %v1433 = vstv %s1424
        %v1434 = vmul.f32 %v1433, %v1429
        %v1435 = vmul.f32 %v1433, %v1432
        %v1436 = vadd.f32 %v1408, %v1434
        %v1437 = vadd.f32 %v1409, %v1435
        %s1438 = sld [smem:[#allocation7 + $0x28]]
        %1439 = vrot.lane.b32.xlu0 %v1306, 96
        %v1440 = vpop.permute.xlu0 %1439
        %1441 = vrot.lane.b32.xlu0 %v1307, 96
        %v1442 = vpop.permute.xlu0 %1441
        %v1443 = vsel %vm417, %v1440, %v1442
        %v1446 = vsel %vm417, %v1442, 0.0
        %v1447 = vstv %s1438
        %v1448 = vmul.f32 %v1447, %v1443
        %v1449 = vmul.f32 %v1447, %v1446
        %v1450 = vadd.f32 %v1422, %v1448
        %v1451 = vadd.f32 %v1423, %v1449
        %s1452 = sld [smem:[#allocation7 + $0x59]]
        %1453 = vrot.lane.b32.xlu0 %v1308, 96
        %v1454 = vpop.permute.xlu0 %1453
        %1455 = vrot.lane.b32.xlu0 %v1309, 96
        %v1456 = vpop.permute.xlu0 %1455
        %v1457 = vsel %vm417, %v1454, %v1456
        %v1460 = vsel %vm417, %v1456, 0.0
        %v1461 = vstv %s1452
        %v1462 = vmul.f32 %v1461, %v1457
        %v1463 = vmul.f32 %v1461, %v1460
        %v1464 = vadd.f32 %v1436, %v1462
        %v1465 = vadd.f32 %v1437, %v1463
        %s1466 = sld [smem:[#allocation7 + $0x2f]]
        %1467 = vrot.lane.b32.xlu0 %v1306, 80
        %v1468 = vpop.permute.xlu0 %1467
        %1469 = vrot.lane.b32.xlu0 %v1307, 80
        %v1470 = vpop.permute.xlu0 %1469
        %v1471 = vsel %vm446, %v1468, %v1470
        %v1474 = vsel %vm446, %v1470, 0.0
        %v1475 = vstv %s1466
        %v1476 = vmul.f32 %v1475, %v1471
        %v1477 = vmul.f32 %v1475, %v1474
        %v1478 = vadd.f32 %v1450, %v1476
        %v1479 = vadd.f32 %v1451, %v1477
        %s1480 = sld [smem:[#allocation7 + $0x60]]
        %1481 = vrot.lane.b32.xlu0 %v1308, 80
        %v1482 = vpop.permute.xlu0 %1481
        %1483 = vrot.lane.b32.xlu0 %v1309, 80
        %v1484 = vpop.permute.xlu0 %1483
        %v1485 = vsel %vm446, %v1482, %v1484
        %v1488 = vsel %vm446, %v1484, 0.0
        %v1489 = vstv %s1480
        %v1490 = vmul.f32 %v1489, %v1485
        %v1491 = vmul.f32 %v1489, %v1488
        %v1492 = vadd.f32 %v1464, %v1490
        %v1493 = vadd.f32 %v1465, %v1491
        %1494 = vrot.lane.b32.xlu0 %v221, 125
        %v1495 = vpop.permute.xlu0 %1494
        %1496 = vrot.lane.b32.xlu0 %v222, 125
        %v1497 = vpop.permute.xlu0 %1496
        %vm1498 = vcmask 1022976
        %v1499 = vsel %vm1498, %v1495, %v1497
        %v1502 = vsel %vm1498, %v1497, 0.0
        %1503 = vrot.lane.b32.xlu0 %v229, 125
        %v1504 = vpop.permute.xlu0 %1503
        %1505 = vrot.lane.b32.xlu0 %v236, 125
        %v1506 = vpop.permute.xlu0 %1505
        %v1507 = vsel %vm1498, %v1504, %v1506
        %v1510 = vsel %vm1498, %v1506, 0.0
        %v1511 = vadd.s32 %v250, 3
        %vm1512 = vcmp.ge.s32.totalorder %v1511, 0
        %vm1513 = vcmp.lt.s32.totalorder %v1511, 16
        %vm1514 = vmand %vm1512, %vm1513
        %v1515 = vsel %vm1514, 1, 0
        %v1516 = vcvt.s32.f32 %v1515
        %v1517 = vmul.f32 %v1499, %v1516
        %v1518 = vmul.f32 %v1502, %v1516
        %v1519 = vmul.f32 %v1507, %v1516
        %v1520 = vmul.f32 %v1510, %v1516
        %s1521 = sld [smem:[#allocation7 + $0x6]]
        %1524 = vrot.lane.b32.xlu0 %v1517, 48
        %v1525 = vpop.permute.xlu0 %1524
        %1526 = vrot.lane.b32.xlu0 %v1518, 48
        %v1527 = vpop.permute.xlu0 %1526
        %v1528 = vsel %vm289, %v1525, %v1527
        %v1531 = vsel %vm289, 0.0, %v1525
        %v1532 = vstv %s1521
        %v1533 = vmul.f32 %v1532, %v1531
        %v1534 = vmul.f32 %v1532, %v1528
        %v1535 = vadd.f32 %v1478, %v1533
        %v1536 = vadd.f32 %v1479, %v1534
        %s1537 = sld [smem:[#allocation7 + $0x37]]
        %1540 = vrot.lane.b32.xlu0 %v1519, 48
        %v1541 = vpop.permute.xlu0 %1540
        %1542 = vrot.lane.b32.xlu0 %v1520, 48
        %v1543 = vpop.permute.xlu0 %1542
        %v1544 = vsel %vm289, %v1541, %v1543
        %v1547 = vsel %vm289, 0.0, %v1541
        %v1548 = vstv %s1537
        %v1549 = vmul.f32 %v1548, %v1547
        %v1550 = vmul.f32 %v1548, %v1544
        %v1551 = vadd.f32 %v1492, %v1549
        %v1552 = vadd.f32 %v1493, %v1550
        %s1553 = sld [smem:[#allocation7 + $0xd]]
        %1554 = vrot.lane.b32.xlu0 %v1517, 32
        %v1555 = vpop.permute.xlu0 %1554
        %1556 = vrot.lane.b32.xlu0 %v1518, 32
        %v1557 = vpop.permute.xlu0 %1556
        %v1558 = vsel %vm245, %v1555, %v1557
        %v1561 = vsel %vm245, 0.0, %v1555
        %v1562 = vstv %s1553
        %v1563 = vmul.f32 %v1562, %v1561
        %v1564 = vmul.f32 %v1562, %v1558
        %v1565 = vadd.f32 %v1535, %v1563
        %v1566 = vadd.f32 %v1536, %v1564
        %s1567 = sld [smem:[#allocation7 + $0x3e]]
        %1568 = vrot.lane.b32.xlu0 %v1519, 32
        %v1569 = vpop.permute.xlu0 %1568
        %1570 = vrot.lane.b32.xlu0 %v1520, 32
        %v1571 = vpop.permute.xlu0 %1570
        %v1572 = vsel %vm245, %v1569, %v1571
        %v1575 = vsel %vm245, 0.0, %v1569
        %v1576 = vstv %s1567
        %v1577 = vmul.f32 %v1576, %v1575
        %v1578 = vmul.f32 %v1576, %v1572
        %v1579 = vadd.f32 %v1551, %v1577
        %v1580 = vadd.f32 %v1552, %v1578
        %s1581 = sld [smem:[#allocation7 + $0x14]]
        %1582 = vrot.lane.b32.xlu0 %v1517, 16
        %v1583 = vpop.permute.xlu0 %1582
        %1584 = vrot.lane.b32.xlu0 %v1518, 16
        %v1585 = vpop.permute.xlu0 %1584
        %v1586 = vsel %vm241, %v1583, %v1585
        %v1589 = vsel %vm241, 0.0, %v1583
        %v1590 = vstv %s1581
        %v1591 = vmul.f32 %v1590, %v1589
        %v1592 = vmul.f32 %v1590, %v1586
        %v1593 = vadd.f32 %v1565, %v1591
        %v1594 = vadd.f32 %v1566, %v1592
        %s1595 = sld [smem:[#allocation7 + $0x45]]
        %1596 = vrot.lane.b32.xlu0 %v1519, 16
        %v1597 = vpop.permute.xlu0 %1596
        %1598 = vrot.lane.b32.xlu0 %v1520, 16
        %v1599 = vpop.permute.xlu0 %1598
        %v1600 = vsel %vm241, %v1597, %v1599
        %v1603 = vsel %vm241, 0.0, %v1597
        %v1604 = vstv %s1595
        %v1605 = vmul.f32 %v1604, %v1603
        %v1606 = vmul.f32 %v1604, %v1600
        %v1607 = vadd.f32 %v1579, %v1605
        %v1608 = vadd.f32 %v1580, %v1606
        %s1609 = sld [smem:[#allocation7 + $0x1b]]
        %v1610 = vstv %s1609
        %v1611 = vmul.f32 %v1610, %v1517
        %v1612 = vmul.f32 %v1610, %v1518
        %v1613 = vadd.f32 %v1593, %v1611
        %v1614 = vadd.f32 %v1594, %v1612
        %s1615 = sld [smem:[#allocation7 + $0x4c]]
        %v1616 = vstv %s1615
        %v1617 = vmul.f32 %v1616, %v1519
        %v1618 = vmul.f32 %v1616, %v1520
        %v1619 = vadd.f32 %v1607, %v1617
        %v1620 = vadd.f32 %v1608, %v1618
        %s1621 = sld [smem:[#allocation7 + $0x22]]
        %1622 = vrot.lane.b32.xlu0 %v1517, 112
        %v1623 = vpop.permute.xlu0 %1622
        %1624 = vrot.lane.b32.xlu0 %v1518, 112
        %v1625 = vpop.permute.xlu0 %1624
        %v1626 = vsel %vm388, %v1623, %v1625
        %v1629 = vsel %vm388, %v1625, 0.0
        %v1630 = vstv %s1621
        %v1631 = vmul.f32 %v1630, %v1626
        %v1632 = vmul.f32 %v1630, %v1629
        %v1633 = vadd.f32 %v1613, %v1631
        %v1634 = vadd.f32 %v1614, %v1632
        %s1635 = sld [smem:[#allocation7 + $0x53]]
        %1636 = vrot.lane.b32.xlu0 %v1519, 112
        %v1637 = vpop.permute.xlu0 %1636
        %1638 = vrot.lane.b32.xlu0 %v1520, 112
        %v1639 = vpop.permute.xlu0 %1638
        %v1640 = vsel %vm388, %v1637, %v1639
        %v1643 = vsel %vm388, %v1639, 0.0
        %v1644 = vstv %s1635
        %v1645 = vmul.f32 %v1644, %v1640
        %v1646 = vmul.f32 %v1644, %v1643
        %v1647 = vadd.f32 %v1619, %v1645
        %v1648 = vadd.f32 %v1620, %v1646
        %s1649 = sld [smem:[#allocation7 + $0x29]]
        %1650 = vrot.lane.b32.xlu0 %v1517, 96
        %v1651 = vpop.permute.xlu0 %1650
        %1652 = vrot.lane.b32.xlu0 %v1518, 96
        %v1653 = vpop.permute.xlu0 %1652
        %v1654 = vsel %vm417, %v1651, %v1653
        %v1657 = vsel %vm417, %v1653, 0.0
        %v1658 = vstv %s1649
        %v1659 = vmul.f32 %v1658, %v1654
        %v1660 = vmul.f32 %v1658, %v1657
        %v1661 = vadd.f32 %v1633, %v1659
        %v1662 = vadd.f32 %v1634, %v1660
        %s1663 = sld [smem:[#allocation7 + $0x5a]]
        %1664 = vrot.lane.b32.xlu0 %v1519, 96
        %v1665 = vpop.permute.xlu0 %1664
        %1666 = vrot.lane.b32.xlu0 %v1520, 96
        %v1667 = vpop.permute.xlu0 %1666
        %v1668 = vsel %vm417, %v1665, %v1667
        %v1671 = vsel %vm417, %v1667, 0.0
        %v1672 = vstv %s1663
        %v1673 = vmul.f32 %v1672, %v1668
        %v1674 = vmul.f32 %v1672, %v1671
        %v1675 = vadd.f32 %v1647, %v1673
        %v1676 = vadd.f32 %v1648, %v1674
        %s1677 = sld [smem:[#allocation7 + $0x30]]
        %1678 = vrot.lane.b32.xlu0 %v1517, 80
        %v1679 = vpop.permute.xlu0 %1678
        %1680 = vrot.lane.b32.xlu0 %v1518, 80
        %v1681 = vpop.permute.xlu0 %1680
        %v1682 = vsel %vm446, %v1679, %v1681
        %v1685 = vsel %vm446, %v1681, 0.0
        %v1686 = vstv %s1677
        %v1687 = vmul.f32 %v1686, %v1682
        %v1688 = vmul.f32 %v1686, %v1685
        %v1689 = vadd.f32 %v1661, %v1687
        %v1690 = vadd.f32 %v1662, %v1688
        %s1691 = sld [smem:[#allocation7 + $0x61]]
        %1692 = vrot.lane.b32.xlu0 %v1519, 80
        %v1693 = vpop.permute.xlu0 %1692
        %1694 = vrot.lane.b32.xlu0 %v1520, 80
        %v1695 = vpop.permute.xlu0 %1694
        %v1696 = vsel %vm446, %v1693, %v1695
        %v1699 = vsel %vm446, %v1695, 0.0
        %v1700 = vstv %s1691
        %v1701 = vmul.f32 %v1700, %v1696
        %v1702 = vmul.f32 %v1700, %v1699
        %v1703 = vadd.f32 %v1675, %v1701
        %v1704 = vadd.f32 %v1676, %v1702
        %v1705 = vadd.f32 %v1689, %v1703
        %v1706 = vadd.f32 %v1690, %v1704
        %s1707 = sld [smem:[#allocation2]]
        %v1708 = vstv %s1707
        %v1709 = vadd.f32 %v1705, %v1708
        %v1710 = vadd.f32 %v1706, %v1708
        %v1711 = vxor.u32 %v1709, 2147483648
        %v1712 = vxor.u32 %v1710, 2147483648
        %v1713 = vmul.f32 %v1711, 1.442695
        %v1714 = vpow.pop %v1713
        %v1715 = vmul.f32 %v1712, 1.442695
        %v1716 = vpow.pop %v1715
        %v1717 = vadd.f32 %v1714, 1.0
        %v1718 = vadd.f32 %v1716, 1.0
        %v1719 = vrcp.pop %v1717
        %v1720 = vmul.f32 1.0, %v1719
        %v1721 = vrcp.pop %v1718
        %v1722 = vmul.f32 1.0, %v1721
        %v1723 = vlaneseq
        %v1724 = vshrl.u32 %v1723, 7
        %v1725 = vsub.s32 0, %v1724
        %v1726 = vrot.slane %v1720, %v1725
        %v1727 = vlaneseq
        %v1728 = vshrl.u32 %v1727, 7
        %v1729 = vsub.s32 0, %v1728
        %v1730 = vrot.slane %v1722, %v1729
        %v1733 = vcombine.low %v1726, %v1730
        %v1735 = vmul.f32 %v202, %v1733
        %1736 = vst [vmem:[%s201] sm:$0xff] %v1735
        %s1737 = sand.u32 %s98, 1
        %s1738 = scalar_lea.sflag [#allocation5], %s1737
        %s1739 = sand.u32 %s98, 1
        %s1740 = smul.addr %s1739, 8
        %s1741 = scalar_lea.vmem [#allocation8], %s1740
        // Predicated region
        $region41: #{tpu_custom_call.1} parent=31 // pred_check
          %p1742 = pneg %p108
        $region42: #{tpu_custom_call.1} parent=31 // pred_check_branch
          %1744 = sbr.rel (%p1742) target = $region44
        $region43: #{tpu_custom_call.1} parent=31 // pred_region
          %s1746 = ssub.s32 128, 128
          %1747 = vsyncadd %s1738, %s1746
          %s1748 = smul.addr %s22, 2
          %s1749 = smul.addr %s1748, 64
          %s1750 = scalar_lea.hbm %s3, %s1749
          %s1752 = sshll.u32 %s1741, 4
          %s1753 = int_to_ptr.vmem [resolvable:$true] %s1752
          %1755 = dma.vmem_to_hbm [thread:$0]  %s1753, 128, %s1750, %s1738
        $region44: #{tpu_custom_call.1} parent=31 // pred_fallthru
          _
      $region32: #{tpu_custom_call.1} parent=5 // pred_fallthru
        _
      %p1756 = scmp.le.s32.totalorder 2, %s17
      // Predicated region
      $region45: #{tpu_custom_call.1} parent=5 // pred_check
        %p1757 = pneg %p1756
      $region46: #{tpu_custom_call.1} parent=5 // pred_check_branch
        %1759 = sbr.rel (%p1757) target = $region48
      $region47: #{tpu_custom_call.1} parent=5 // pred_region
        %s1760 = ssub.s32 %s17, 2
        // Predicated region
        $region49: #{tpu_custom_call.1} parent=47 // pred_check
          %p1761 = pneg %p114
        $region50: #{tpu_custom_call.1} parent=47 // pred_check_branch
          %1763 = sbr.rel (%p1761) target = $region52
        $region51: #{tpu_custom_call.1} parent=47 // pred_region
          %s1764 = sand.u32 %s99, 1
          %s1765 = scalar_lea.sflag [#allocation5], %s1764
          %s1766 = sand.u32 %s99, 1
          %s1767 = smul.addr %s1766, 8
          %s1768 = scalar_lea.vmem [#allocation8], %s1767
          %1769 = dma.done %s1765, 128
        $region52: #{tpu_custom_call.1} parent=47 // pred_fallthru
          _
      $region48: #{tpu_custom_call.1} parent=5 // pred_fallthru
        _
    $region6: #{tpu_custom_call.1} parent=1 // loop_footer
      %s21 = sadd.s32 1, %s17
    $region7: #{tpu_custom_call.1} parent=1 // loop_footer_branch
      %16 = sbr.rel target = $region3
    $region8: #{tpu_custom_call.1} parent=1 // loop_exit
      _
    %1770 = vsyncpa [#allocation4], 1
    %s1771 = scalar_lea.sflag [#allocation4], 1
    %1772 = vsyncpa %s1771, 1
    %1773 = vsyncpa [#allocation5], 1
    %s1774 = scalar_lea.sflag [#allocation5], 1
    %1775 = vsyncpa %s1774, 1
    %1776 = vsyncpa [#allocation6], 1
    %s1777 = scalar_lea.sflag [#allocation6], 1
    %1778 = vsyncpa %s1777, 1

</llo_original>
